<compile_context>
chip_gen: v6e
topology: v6e:2x2x1
jax: 0.10.0
libtpu: 0.0.40
codegen_flags: <defaults>
</compile_context>

<pallas_src>
import math

import jax
import jax.numpy as jnp
from jax.experimental import pallas as pl
from jax.experimental.pallas import tpu as pltpu


_SQRT_HALF = 1.0 / math.sqrt(2.0)
_SQRT_2_OVER_PI = math.sqrt(2.0 / math.pi)


def _gelu_exact(x):
    # PyTorch default nn.GELU(): 0.5 * x * (1 + erf(x / sqrt(2))).
    # erf has no EUP instruction (VALU polynomial); computed in f32.
    xf = x.astype(jnp.float32)
    return (0.5 * xf * (1.0 + jax.lax.erf(xf * _SQRT_HALF))).astype(x.dtype)


def _gelu_tanh(x):
    # nn.GELU(approximate="tanh"): tanh goes to the (otherwise idle) EUP slot.
    xf = x.astype(jnp.float32)
    inner = _SQRT_2_OVER_PI * (xf + 0.044715 * xf * xf * xf)
    return (0.5 * xf * (1.0 + jnp.tanh(inner))).astype(x.dtype)


def _make_kernel(compute_dtype, approximate_gelu):
    gelu = _gelu_tanh if approximate_gelu else _gelu_exact
    cd = compute_dtype

    def kernel(x_ref, w0_ref, b0_ref, w1_ref, b1_ref,
               w2_ref, b2_ref, w3_ref, b3_ref, o_ref):
        # Matmul operands in `cd` (bf16 -> full-rate MXU on v5e/v6e/v7x) with
        # f32 accumulation; bias add + GELU stay in f32.
        # TODO(synk): on v6e/v7x the GELU could run in bf16 (2 elems per vreg
        # row) to halve VALU cost; kept f32 since v5e has no bf16 VPU.
        x = x_ref[...].astype(cd)
        h = jnp.dot(x, w0_ref[...], preferred_element_type=jnp.float32) + b0_ref[...]
        h = jnp.dot(h.astype(cd), w1_ref[...],
                    preferred_element_type=jnp.float32) + b1_ref[...]
        h = gelu(h)
        h = jnp.dot(h.astype(cd), w2_ref[...],
                    preferred_element_type=jnp.float32) + b2_ref[...]
        h = gelu(h)
        out = jnp.dot(h.astype(cd), w3_ref[...],
                      preferred_element_type=jnp.float32) + b3_ref[...]
        o_ref[...] = out.astype(o_ref.dtype)

    return kernel


def _round_up(x, m):
    return (x + m - 1) // m * m


def _cdiv(a, b):
    return (a + b - 1) // b


def _pad2(a, rows, cols):
    pr, pc = rows - a.shape[0], cols - a.shape[1]
    if pr == 0 and pc == 0:
        return a
    return jnp.pad(a, ((0, pr), (0, pc)))


def _vmem_capacity_bytes():
    try:
        return int(pltpu.get_tpu_info().vmem_capacity_bytes)
    except Exception:
        return 64 * 1024 * 1024  # conservative: v7x per-TensorCore VMEM


def prepare_params(params, *, compute_dtype=jnp.bfloat16):
    """Pad feature dims to 128-lane multiples and cast the matmul operands
    ONCE at parameter-load time (removes per-call HBM passes over the weight
    set).  Weights are stored (fan_in, fan_out); biases (1, fan_out)."""
    in_dim, hid_dim = params["w0"].shape
    out_dim = params["w3"].shape[1]
    in_p, hid_p, out_p = (_round_up(d, 128) for d in (in_dim, hid_dim, out_dim))
    cd = jnp.dtype(compute_dtype)
    return {
        "dims": (in_dim, hid_dim, out_dim),
        "compute_dtype": cd,
        "w0": _pad2(params["w0"], in_p, hid_p).astype(cd),
        "w1": _pad2(params["w1"], hid_p, hid_p).astype(cd),
        "w2": _pad2(params["w2"], hid_p, hid_p).astype(cd),
        "w3": _pad2(params["w3"], hid_p, out_p).astype(cd),
        "b0": _pad2(params["b0"].astype(jnp.float32), 1, hid_p),
        "b1": _pad2(params["b1"].astype(jnp.float32), 1, hid_p),
        "b2": _pad2(params["b2"].astype(jnp.float32), 1, hid_p),
        "b3": _pad2(params["b3"].astype(jnp.float32), 1, out_p),
    }


def _choose_tile_n(N, in_p, hid_p, out_p, x_bytes, out_bytes, w_bytes, vmem_cap):
    n8 = _round_up(max(N, 1), 8)
    floor_tile = min(256, n8)          # feed the full MXU height when data allows
    # Per-row VMEM footprint: double-buffered x/out tiles + f32 intermediates.
    per_row = 2 * (in_p * x_bytes + out_p * out_bytes) + 6 * hid_p * 4
    usable = vmem_cap - (8 << 20) - w_bytes
    vmem_rows = (usable // max(per_row, 1)) // 8 * 8 if usable > 0 else 8
    tile = max(floor_tile, min(2048, vmem_rows, n8))
    tile = min(tile, n8)
    # Force >=2 grid steps (pipelining; both v7x TensorCores) only when there
    # is enough data for two full >=256-row tiles.
    if n8 >= 512:
        tile = min(tile, _round_up(_cdiv(n8, 2), 8))
        tile = max(tile, 256)
    tile = _round_up(tile, 8)
    # Prefer an even number of grid steps (v7x shards the parallel axis on 2 TCs).
    steps = _cdiv(N, tile)
    if steps > 1 and steps % 2 == 1:
        alt = _round_up(_cdiv(N, steps + 1), 8)
        if alt >= 8 and _cdiv(N, alt) % 2 == 0:
            tile = alt
    return tile


def property_regressor(x, params, *, tile_n=None, compute_dtype=None,
                       approximate_gelu=False):
    """Fused PropertyRegressor forward.

    x:      (..., in_dim) array; leading dims are flattened onto the row axis.
    params: raw params (w0..w3 (fan_in,fan_out), b0..b3 (1,fan_out)) or the
            output of prepare_params() (preferred: pad/cast happens once).
    compute_dtype: matmul operand dtype (default bfloat16; accumulation is
            always f32).  Pass jnp.float32 for closest parity with PyTorch.
    approximate_gelu: use the tanh GELU (EUP) instead of the exact erf form.
    """
    if "dims" not in params:
        params = prepare_params(
            params,
            compute_dtype=jnp.bfloat16 if compute_dtype is None else compute_dtype)
    elif compute_dtype is not None and jnp.dtype(compute_dtype) != params["compute_dtype"]:
        raise ValueError("params were prepared with a different compute_dtype; "
                         "re-run prepare_params(raw_params, compute_dtype=...).")
    cd = params["compute_dtype"]
    in_dim, hid_dim, out_dim = params["dims"]
    if x.shape[-1] != in_dim:
        raise ValueError(f"expected last dim {in_dim}, got {x.shape[-1]}")

    lead_shape = x.shape[:-1]
    x2 = x.reshape(-1, in_dim)
    N = x2.shape[0]
    out_dtype = x.dtype

    in_p = params["w0"].shape[0]
    hid_p = params["w1"].shape[0]
    out_p = params["w3"].shape[1]

    # Lane-pad x's feature dim only when needed (otherwise x is passed through
    # with no wrapper copy); rows are never padded -- the last grid block is
    # handled by Pallas' block masking.
    xp = x2 if in_p == in_dim else _pad2(x2, N, in_p)

    vmem_cap = _vmem_capacity_bytes()
    w_bytes = sum(int(params[k].size) * params[k].dtype.itemsize
                  for k in ("w0", "b0", "w1", "b1", "w2", "b2", "w3", "b3"))
    x_bytes = jnp.dtype(xp.dtype).itemsize
    o_bytes = jnp.dtype(out_dtype).itemsize

    if tile_n is None:
        tile_n = _choose_tile_n(N, in_p, hid_p, out_p, x_bytes, o_bytes,
                                w_bytes, vmem_cap)
    tile_n = max(8, _round_up(int(tile_n), 8))
    grid = (_cdiv(N, tile_n),)

    flops = 2 * N * (in_dim * hid_dim + 2 * hid_dim * hid_dim + hid_dim * out_dim)
    bytes_accessed = N * in_p * x_bytes + w_bytes + N * out_p * o_bytes
    cost = pl.CostEstimate(flops=int(flops),
                           transcendentals=int(2 * N * hid_dim),
                           bytes_accessed=int(bytes_accessed))

    def vmem_need(weight_bufs):
        return (2 * tile_n * (in_p * x_bytes + out_p * o_bytes)
                + weight_bufs * w_bytes
                + 6 * tile_n * hid_p * 4)

    kernel = _make_kernel(cd, approximate_gelu)

    def run(single_buffer_weights):
        if single_buffer_weights:
            # Grid-invariant blocks: fetched once, no need for double-buffering.
            wspec = lambda shape: pl.BlockSpec(shape, lambda i: (0, 0),
                                               pipeline_mode=pl.Buffered(1))
        else:
            wspec = lambda shape: pl.BlockSpec(shape, lambda i: (0, 0))
        in_specs = [
            pl.BlockSpec((tile_n, in_p), lambda i: (i, 0)),
            wspec((in_p, hid_p)), wspec((1, hid_p)),     # w0, b0
            wspec((hid_p, hid_p)), wspec((1, hid_p)),    # w1, b1
            wspec((hid_p, hid_p)), wspec((1, hid_p)),    # w2, b2
            wspec((hid_p, out_p)), wspec((1, out_p)),    # w3, b3
        ]
        out_spec = pl.BlockSpec((tile_n, out_p), lambda i: (i, 0))
        need = vmem_need(1 if single_buffer_weights else 2)
        cap = max(vmem_cap - (8 << 20), 16 << 20)   # never exceed physical VMEM
        vmem_limit = int(min(max(int(1.5 * need), 32 << 20), cap))
        return pl.pallas_call(
            kernel,
            out_shape=jax.ShapeDtypeStruct((N, out_p), out_dtype),
            grid_spec=pltpu.PrefetchScalarGridSpec(
                num_scalar_prefetch=0,
                grid=grid,
                in_specs=in_specs,
                out_specs=out_spec,
            ),
            compiler_params=pltpu.CompilerParams(
                dimension_semantics=("parallel",),
                vmem_limit_bytes=vmem_limit,
            ),
            cost_estimate=cost,
        )(xp, params["w0"], params["b0"], params["w1"], params["b1"],
          params["w2"], params["b2"], params["w3"], params["b3"])

    # TODO(synk): when hid_dim is large enough that the resident weight set
    # exceeds ~75% of VMEM (v7x first), switch to a K/N-tiled per-layer
    # variant instead of this all-weights-resident design.
    try:
        out_padded = run(single_buffer_weights=True)
    except Exception:
        # Fallback if this JAX build rejects pl.Buffered(1) on these blocks.
        out_padded = run(single_buffer_weights=False)

    out2 = out_padded if out_p == out_dim else out_padded[:, :out_dim]
    return out2.reshape(*lead_shape, out_dim)


def init_params(key, in_dim, hid_dim, out_dim):
    """nn.Linear-style init (uniform +/- 1/sqrt(fan_in)).  Weights stored
    transposed relative to PyTorch: (fan_in, fan_out)."""
    def linear(k, fi, fo):
        kw, kb = jax.random.split(k)
        bound = 1.0 / math.sqrt(fi)
        w = jax.random.uniform(kw, (fi, fo), jnp.float32, -bound, bound)
        b = jax.random.uniform(kb, (1, fo), jnp.float32, -bound, bound)
        return w, b

    k0, k1, k2, k3 = jax.random.split(key, 4)
    w0, b0 = linear(k0, in_dim, hid_dim)
    w1, b1 = linear(k1, hid_dim, hid_dim)
    w2, b2 = linear(k2, hid_dim, hid_dim)
    w3, b3 = linear(k3, hid_dim, out_dim)
    return dict(w0=w0, b0=b0, w1=w1, b1=b1, w2=w2, b2=b2, w3=w3, b3=b3)


def _reference(x, p, *, approximate_gelu=False):
    gelu = _gelu_tanh if approximate_gelu else _gelu_exact
    h = x @ p["w0"] + p["b0"]
    h = gelu(h @ p["w1"] + p["b1"])
    h = gelu(h @ p["w2"] + p["b2"])
    return h @ p["w3"] + p["b3"]


if __name__ == "__main__":
    key = jax.random.PRNGKey(0)
    kx, kp = jax.random.split(key)

    batch, seq = 2, 8
    in_dim, hid_dim, out_dim = 32, 32, 8

    x = jax.random.normal(kx, (batch, seq, in_dim), jnp.float32)
    params = init_params(kp, in_dim, hid_dim, out_dim)

    x2 = x.reshape(-1, in_dim)
    ref = _reference(x2, params).reshape(batch, seq, out_dim)

    # f32 operand path: closest parity with the PyTorch forward (eval mode).
    p_f32 = prepare_params(params, compute_dtype=jnp.float32)
    out_f32 = jax.block_until_ready(property_regressor(x, p_f32))
    assert out_f32.shape == (batch, seq, out_dim)
    assert jnp.allclose(out_f32, ref, atol=1e-4, rtol=1e-4)

    # Default bf16-operand path (f32 accumulation): full-rate MXU.
    p_bf16 = prepare_params(params)  # compute_dtype defaults to bfloat16
    out_bf16 = jax.block_until_ready(property_regressor(x, p_bf16))
    assert out_bf16.shape == (batch, seq, out_dim)
    assert jnp.allclose(out_bf16, ref, atol=1e-1, rtol=1e-1)

    # Optional tanh-GELU (EUP transcendental) variant, checked against the
    # matching tanh reference.
    ref_tanh = _reference(x2, params, approximate_gelu=True).reshape(
        batch, seq, out_dim)
    out_tanh = jax.block_until_ready(
        property_regressor(x, p_f32, approximate_gelu=True))
    assert jnp.allclose(out_tanh, ref_tanh, atol=1e-4, rtol=1e-4)

    print("KERNEL_OK")
</pallas_src>

<mosaic_0001>
module attributes {stable_mosaic.version = 11 : i64} {
  func.func @kernel(%arg0: i32, %arg1: memref<16x128xf32, #tpu.memory_space<vmem>>, %arg2: memref<128x128xf32, #tpu.memory_space<vmem>>, %arg3: memref<1x128xf32, #tpu.memory_space<vmem>>, %arg4: memref<128x128xf32, #tpu.memory_space<vmem>>, %arg5: memref<1x128xf32, #tpu.memory_space<vmem>>, %arg6: memref<128x128xf32, #tpu.memory_space<vmem>>, %arg7: memref<1x128xf32, #tpu.memory_space<vmem>>, %arg8: memref<128x128xf32, #tpu.memory_space<vmem>>, %arg9: memref<1x128xf32, #tpu.memory_space<vmem>>, %arg10: memref<16x128xf32, #tpu.memory_space<vmem>>) attributes {dimension_semantics = [#tpu.dimension_semantics<parallel>], iteration_bounds = array<i64: 1>, scalar_prefetch = 0 : i64, scratch_operands = 0 : i64, tpu.core_type = #tpu.core_type<tc>, window_params = [{transform_indices = @transform_0, window_bounds = array<i64: 16, 128>}, {pipeline_mode = #tpu.pipeline_mode<synchronous>, transform_indices = @transform_1, window_bounds = array<i64: 128, 128>}, {pipeline_mode = #tpu.pipeline_mode<synchronous>, transform_indices = @transform_2, window_bounds = array<i64: 1, 128>}, {pipeline_mode = #tpu.pipeline_mode<synchronous>, transform_indices = @transform_3, window_bounds = array<i64: 128, 128>}, {pipeline_mode = #tpu.pipeline_mode<synchronous>, transform_indices = @transform_4, window_bounds = array<i64: 1, 128>}, {pipeline_mode = #tpu.pipeline_mode<synchronous>, transform_indices = @transform_5, window_bounds = array<i64: 128, 128>}, {pipeline_mode = #tpu.pipeline_mode<synchronous>, transform_indices = @transform_6, window_bounds = array<i64: 1, 128>}, {pipeline_mode = #tpu.pipeline_mode<synchronous>, transform_indices = @transform_7, window_bounds = array<i64: 128, 128>}, {pipeline_mode = #tpu.pipeline_mode<synchronous>, transform_indices = @transform_8, window_bounds = array<i64: 1, 128>}, {transform_indices = @transform_9, window_bounds = array<i64: 16, 128>}]} {
    %c0 = arith.constant 0 : index
    %c0_0 = arith.constant 0 : index
    %0 = vector.load %arg1[%c0, %c0_0] : memref<16x128xf32, #tpu.memory_space<vmem>>, vector<16x128xf32>
    %c0_1 = arith.constant 0 : index
    %c0_2 = arith.constant 0 : index
    %1 = vector.load %arg2[%c0_1, %c0_2] : memref<128x128xf32, #tpu.memory_space<vmem>>, vector<128x128xf32>
    %cst = arith.constant dense<0.000000e+00> : vector<16x128xf32>
    %2 = tpu.matmul %0, %1, %cst {dimension_numbers = #tpu.dot_dimension_numbers<[1], [0], [0], [1], [0, 0, 1, 1], [], []>} : vector<16x128xf32>, vector<128x128xf32>, vector<16x128xf32> -> vector<16x128xf32>
    %c0_3 = arith.constant 0 : index
    %c0_4 = arith.constant 0 : index
    %3 = vector.load %arg3[%c0_3, %c0_4] : memref<1x128xf32, #tpu.memory_space<vmem>>, vector<1x128xf32>
    %4 = vector.broadcast %3 : vector<1x128xf32> to vector<16x128xf32>
    %5 = arith.addf %2, %4 : vector<16x128xf32>
    %c0_5 = arith.constant 0 : index
    %c0_6 = arith.constant 0 : index
    %6 = vector.load %arg4[%c0_5, %c0_6] : memref<128x128xf32, #tpu.memory_space<vmem>>, vector<128x128xf32>
    %cst_7 = arith.constant dense<0.000000e+00> : vector<16x128xf32>
    %7 = tpu.matmul %5, %6, %cst_7 {dimension_numbers = #tpu.dot_dimension_numbers<[1], [0], [0], [1], [0, 0, 1, 1], [], []>} : vector<16x128xf32>, vector<128x128xf32>, vector<16x128xf32> -> vector<16x128xf32>
    %c0_8 = arith.constant 0 : index
    %c0_9 = arith.constant 0 : index
    %8 = vector.load %arg5[%c0_8, %c0_9] : memref<1x128xf32, #tpu.memory_space<vmem>>, vector<1x128xf32>
    %9 = vector.broadcast %8 : vector<1x128xf32> to vector<16x128xf32>
    %10 = arith.addf %7, %9 : vector<16x128xf32>
    %cst_10 = arith.constant 5.000000e-01 : f32
    %11 = vector.broadcast %cst_10 : f32 to vector<16x128xf32>
    %12 = arith.mulf %11, %10 : vector<16x128xf32>
    %cst_11 = arith.constant 0.707106769 : f32
    %13 = vector.broadcast %cst_11 : f32 to vector<16x128xf32>
    %14 = arith.mulf %10, %13 : vector<16x128xf32>
    %15 = math.erf %14 : vector<16x128xf32>
    %cst_12 = arith.constant 1.000000e+00 : f32
    %16 = vector.broadcast %cst_12 : f32 to vector<16x128xf32>
    %17 = arith.addf %16, %15 : vector<16x128xf32>
    %18 = arith.mulf %12, %17 : vector<16x128xf32>
    %c0_13 = arith.constant 0 : index
    %c0_14 = arith.constant 0 : index
    %19 = vector.load %arg6[%c0_13, %c0_14] : memref<128x128xf32, #tpu.memory_space<vmem>>, vector<128x128xf32>
    %cst_15 = arith.constant dense<0.000000e+00> : vector<16x128xf32>
    %20 = tpu.matmul %18, %19, %cst_15 {dimension_numbers = #tpu.dot_dimension_numbers<[1], [0], [0], [1], [0, 0, 1, 1], [], []>} : vector<16x128xf32>, vector<128x128xf32>, vector<16x128xf32> -> vector<16x128xf32>
    %c0_16 = arith.constant 0 : index
    %c0_17 = arith.constant 0 : index
    %21 = vector.load %arg7[%c0_16, %c0_17] : memref<1x128xf32, #tpu.memory_space<vmem>>, vector<1x128xf32>
    %22 = vector.broadcast %21 : vector<1x128xf32> to vector<16x128xf32>
    %23 = arith.addf %20, %22 : vector<16x128xf32>
    %cst_18 = arith.constant 5.000000e-01 : f32
    %24 = vector.broadcast %cst_18 : f32 to vector<16x128xf32>
    %25 = arith.mulf %24, %23 : vector<16x128xf32>
    %cst_19 = arith.constant 0.707106769 : f32
    %26 = vector.broadcast %cst_19 : f32 to vector<16x128xf32>
    %27 = arith.mulf %23, %26 : vector<16x128xf32>
    %28 = math.erf %27 : vector<16x128xf32>
    %cst_20 = arith.constant 1.000000e+00 : f32
    %29 = vector.broadcast %cst_20 : f32 to vector<16x128xf32>
    %30 = arith.addf %29, %28 : vector<16x128xf32>
    %31 = arith.mulf %25, %30 : vector<16x128xf32>
    %c0_21 = arith.constant 0 : index
    %c0_22 = arith.constant 0 : index
    %32 = vector.load %arg8[%c0_21, %c0_22] : memref<128x128xf32, #tpu.memory_space<vmem>>, vector<128x128xf32>
    %cst_23 = arith.constant dense<0.000000e+00> : vector<16x128xf32>
    %33 = tpu.matmul %31, %32, %cst_23 {dimension_numbers = #tpu.dot_dimension_numbers<[1], [0], [0], [1], [0, 0, 1, 1], [], []>} : vector<16x128xf32>, vector<128x128xf32>, vector<16x128xf32> -> vector<16x128xf32>
    %c0_24 = arith.constant 0 : index
    %c0_25 = arith.constant 0 : index
    %34 = vector.load %arg9[%c0_24, %c0_25] : memref<1x128xf32, #tpu.memory_space<vmem>>, vector<1x128xf32>
    %35 = vector.broadcast %34 : vector<1x128xf32> to vector<16x128xf32>
    %36 = arith.addf %33, %35 : vector<16x128xf32>
    %c0_26 = arith.constant 0 : index
    %c0_27 = arith.constant 0 : index
    %37 = vector.load %arg10[%c0_26, %c0_27] : memref<16x128xf32, #tpu.memory_space<vmem>>, vector<16x128xf32>
    tpu.vector_store %arg10[%c0_26, %c0_27], %36 {strides = array<i32>} : memref<16x128xf32, #tpu.memory_space<vmem>>, vector<16x128xf32>,
    return
  }
  func.func @transform_0(%arg0: i32) -> (i32, i32) {
    %c0_i32 = arith.constant 0 : i32
    %c0_i32_0 = arith.constant 0 : i32
    return %arg0, %c0_i32 : i32, i32
  }
  func.func @transform_1(%arg0: i32) -> (i32, i32) {
    %c0_i32 = arith.constant 0 : i32
    %c0_i32_0 = arith.constant 0 : i32
    %c0_i32_1 = arith.constant 0 : i32
    return %c0_i32, %c0_i32_0 : i32, i32
  }
  func.func @transform_2(%arg0: i32) -> (i32, i32) {
    %c0_i32 = arith.constant 0 : i32
    %c0_i32_0 = arith.constant 0 : i32
    %c0_i32_1 = arith.constant 0 : i32
    return %c0_i32, %c0_i32_0 : i32, i32
  }
  func.func @transform_3(%arg0: i32) -> (i32, i32) {
    %c0_i32 = arith.constant 0 : i32
    %c0_i32_0 = arith.constant 0 : i32
    %c0_i32_1 = arith.constant 0 : i32
    return %c0_i32, %c0_i32_0 : i32, i32
  }
  func.func @transform_4(%arg0: i32) -> (i32, i32) {
    %c0_i32 = arith.constant 0 : i32
    %c0_i32_0 = arith.constant 0 : i32
    %c0_i32_1 = arith.constant 0 : i32
    return %c0_i32, %c0_i32_0 : i32, i32
  }
  func.func @transform_5(%arg0: i32) -> (i32, i32) {
    %c0_i32 = arith.constant 0 : i32
    %c0_i32_0 = arith.constant 0 : i32
    %c0_i32_1 = arith.constant 0 : i32
    return %c0_i32, %c0_i32_0 : i32, i32
  }
  func.func @transform_6(%arg0: i32) -> (i32, i32) {
    %c0_i32 = arith.constant 0 : i32
    %c0_i32_0 = arith.constant 0 : i32
    %c0_i32_1 = arith.constant 0 : i32
    return %c0_i32, %c0_i32_0 : i32, i32
  }
  func.func @transform_7(%arg0: i32) -> (i32, i32) {
    %c0_i32 = arith.constant 0 : i32
    %c0_i32_0 = arith.constant 0 : i32
    %c0_i32_1 = arith.constant 0 : i32
    return %c0_i32, %c0_i32_0 : i32, i32
  }
  func.func @transform_8(%arg0: i32) -> (i32, i32) {
    %c0_i32 = arith.constant 0 : i32
    %c0_i32_0 = arith.constant 0 : i32
    %c0_i32_1 = arith.constant 0 : i32
    return %c0_i32, %c0_i32_0 : i32, i32
  }
  func.func @transform_9(%arg0: i32) -> (i32, i32) {
    %c0_i32 = arith.constant 0 : i32
    %c0_i32_0 = arith.constant 0 : i32
    return %arg0, %c0_i32 : i32, i32
  }
}

module attributes {stable_mosaic.version = 11 : i64} {
  func.func @kernel(%arg0: i32, %arg1: memref<16x128xf32, #tpu.memory_space<vmem>>, %arg2: memref<128x128xf32, #tpu.memory_space<vmem>>, %arg3: memref<1x128xf32, #tpu.memory_space<vmem>>, %arg4: memref<128x128xf32, #tpu.memory_space<vmem>>, %arg5: memref<1x128xf32, #tpu.memory_space<vmem>>, %arg6: memref<128x128xf32, #tpu.memory_space<vmem>>, %arg7: memref<1x128xf32, #tpu.memory_space<vmem>>, %arg8: memref<128x128xf32, #tpu.memory_space<vmem>>, %arg9: memref<1x128xf32, #tpu.memory_space<vmem>>, %arg10: memref<16x128xf32, #tpu.memory_space<vmem>>) attributes {dimension_semantics = [#tpu.dimension_semantics<parallel>], iteration_bounds = array<i64: 1>, scalar_prefetch = 0 : i64, scratch_operands = 0 : i64, tpu.core_type = #tpu.core_type<tc>, window_params = [{transform_indices = @transform_0, window_bounds = array<i64: 16, 128>}, {pipeline_mode = #tpu.pipeline_mode<synchronous>, transform_indices = @transform_1, window_bounds = array<i64: 128, 128>}, {pipeline_mode = #tpu.pipeline_mode<synchronous>, transform_indices = @transform_2, window_bounds = array<i64: 1, 128>}, {pipeline_mode = #tpu.pipeline_mode<synchronous>, transform_indices = @transform_3, window_bounds = array<i64: 128, 128>}, {pipeline_mode = #tpu.pipeline_mode<synchronous>, transform_indices = @transform_4, window_bounds = array<i64: 1, 128>}, {pipeline_mode = #tpu.pipeline_mode<synchronous>, transform_indices = @transform_5, window_bounds = array<i64: 128, 128>}, {pipeline_mode = #tpu.pipeline_mode<synchronous>, transform_indices = @transform_6, window_bounds = array<i64: 1, 128>}, {pipeline_mode = #tpu.pipeline_mode<synchronous>, transform_indices = @transform_7, window_bounds = array<i64: 128, 128>}, {pipeline_mode = #tpu.pipeline_mode<synchronous>, transform_indices = @transform_8, window_bounds = array<i64: 1, 128>}, {transform_indices = @transform_9, window_bounds = array<i64: 16, 128>}]} {
    %c0 = arith.constant 0 : index
    %c0_0 = arith.constant 0 : index
    %0 = vector.load %arg1[%c0, %c0_0] : memref<16x128xf32, #tpu.memory_space<vmem>>, vector<16x128xf32>
    %c0_1 = arith.constant 0 : index
    %c0_2 = arith.constant 0 : index
    %1 = vector.load %arg2[%c0_1, %c0_2] : memref<128x128xf32, #tpu.memory_space<vmem>>, vector<128x128xf32>
    %cst = arith.constant dense<0.000000e+00> : vector<16x128xf32>
    %2 = tpu.matmul %0, %1, %cst {dimension_numbers = #tpu.dot_dimension_numbers<[1], [0], [0], [1], [0, 0, 1, 1], [], []>} : vector<16x128xf32>, vector<128x128xf32>, vector<16x128xf32> -> vector<16x128xf32>
    %c0_3 = arith.constant 0 : index
    %c0_4 = arith.constant 0 : index
    %3 = vector.load %arg3[%c0_3, %c0_4] : memref<1x128xf32, #tpu.memory_space<vmem>>, vector<1x128xf32>
    %4 = vector.broadcast %3 : vector<1x128xf32> to vector<16x128xf32>
    %5 = arith.addf %2, %4 : vector<16x128xf32>
    %c0_5 = arith.constant 0 : index
    %c0_6 = arith.constant 0 : index
    %6 = vector.load %arg4[%c0_5, %c0_6] : memref<128x128xf32, #tpu.memory_space<vmem>>, vector<128x128xf32>
    %cst_7 = arith.constant dense<0.000000e+00> : vector<16x128xf32>
    %7 = tpu.matmul %5, %6, %cst_7 {dimension_numbers = #tpu.dot_dimension_numbers<[1], [0], [0], [1], [0, 0, 1, 1], [], []>} : vector<16x128xf32>, vector<128x128xf32>, vector<16x128xf32> -> vector<16x128xf32>
    %c0_8 = arith.constant 0 : index
    %c0_9 = arith.constant 0 : index
    %8 = vector.load %arg5[%c0_8, %c0_9] : memref<1x128xf32, #tpu.memory_space<vmem>>, vector<1x128xf32>
    %9 = vector.broadcast %8 : vector<1x128xf32> to vector<16x128xf32>
    %10 = arith.addf %7, %9 : vector<16x128xf32>
    %cst_10 = arith.constant 5.000000e-01 : f32
    %11 = vector.broadcast %cst_10 : f32 to vector<16x128xf32>
    %12 = arith.mulf %11, %10 : vector<16x128xf32>
    %cst_11 = arith.constant 0.707106769 : f32
    %13 = vector.broadcast %cst_11 : f32 to vector<16x128xf32>
    %14 = arith.mulf %10, %13 : vector<16x128xf32>
    %15 = math.erf %14 : vector<16x128xf32>
    %cst_12 = arith.constant 1.000000e+00 : f32
    %16 = vector.broadcast %cst_12 : f32 to vector<16x128xf32>
    %17 = arith.addf %16, %15 : vector<16x128xf32>
    %18 = arith.mulf %12, %17 : vector<16x128xf32>
    %c0_13 = arith.constant 0 : index
    %c0_14 = arith.constant 0 : index
    %19 = vector.load %arg6[%c0_13, %c0_14] : memref<128x128xf32, #tpu.memory_space<vmem>>, vector<128x128xf32>
    %cst_15 = arith.constant dense<0.000000e+00> : vector<16x128xf32>
    %20 = tpu.matmul %18, %19, %cst_15 {dimension_numbers = #tpu.dot_dimension_numbers<[1], [0], [0], [1], [0, 0, 1, 1], [], []>} : vector<16x128xf32>, vector<128x128xf32>, vector<16x128xf32> -> vector<16x128xf32>
    %c0_16 = arith.constant 0 : index
    %c0_17 = arith.constant 0 : index
    %21 = vector.load %arg7[%c0_16, %c0_17] : memref<1x128xf32, #tpu.memory_space<vmem>>, vector<1x128xf32>
    %22 = vector.broadcast %21 : vector<1x128xf32> to vector<16x128xf32>
    %23 = arith.addf %20, %22 : vector<16x128xf32>
    %cst_18 = arith.constant 5.000000e-01 : f32
    %24 = vector.broadcast %cst_18 : f32 to vector<16x128xf32>
    %25 = arith.mulf %24, %23 : vector<16x128xf32>
    %cst_19 = arith.constant 0.707106769 : f32
    %26 = vector.broadcast %cst_19 : f32 to vector<16x128xf32>
    %27 = arith.mulf %23, %26 : vector<16x128xf32>
    %28 = math.erf %27 : vector<16x128xf32>
    %cst_20 = arith.constant 1.000000e+00 : f32
    %29 = vector.broadcast %cst_20 : f32 to vector<16x128xf32>
    %30 = arith.addf %29, %28 : vector<16x128xf32>
    %31 = arith.mulf %25, %30 : vector<16x128xf32>
    %c0_21 = arith.constant 0 : index
    %c0_22 = arith.constant 0 : index
    %32 = vector.load %arg8[%c0_21, %c0_22] : memref<128x128xf32, #tpu.memory_space<vmem>>, vector<128x128xf32>
    %cst_23 = arith.constant dense<0.000000e+00> : vector<16x128xf32>
    %33 = tpu.matmul %31, %32, %cst_23 {dimension_numbers = #tpu.dot_dimension_numbers<[1], [0], [0], [1], [0, 0, 1, 1], [], []>} : vector<16x128xf32>, vector<128x128xf32>, vector<16x128xf32> -> vector<16x128xf32>
    %c0_24 = arith.constant 0 : index
    %c0_25 = arith.constant 0 : index
    %34 = vector.load %arg9[%c0_24, %c0_25] : memref<1x128xf32, #tpu.memory_space<vmem>>, vector<1x128xf32>
    %35 = vector.broadcast %34 : vector<1x128xf32> to vector<16x128xf32>
    %36 = arith.addf %33, %35 : vector<16x128xf32>
    %c0_26 = arith.constant 0 : index
    %c0_27 = arith.constant 0 : index
    %37 = vector.load %arg10[%c0_26, %c0_27] : memref<16x128xf32, #tpu.memory_space<vmem>>, vector<16x128xf32>
    tpu.vector_store %arg10[%c0_26, %c0_27], %36 {strides = array<i32>} : memref<16x128xf32, #tpu.memory_space<vmem>>, vector<16x128xf32>,
    return
  }
  func.func @transform_0(%arg0: i32) -> (i32, i32) {
    %c0_i32 = arith.constant 0 : i32
    %c0_i32_0 = arith.constant 0 : i32
    return %arg0, %c0_i32 : i32, i32
  }
  func.func @transform_1(%arg0: i32) -> (i32, i32) {
    %c0_i32 = arith.constant 0 : i32
    %c0_i32_0 = arith.constant 0 : i32
    %c0_i32_1 = arith.constant 0 : i32
    return %c0_i32, %c0_i32_0 : i32, i32
  }
  func.func @transform_2(%arg0: i32) -> (i32, i32) {
    %c0_i32 = arith.constant 0 : i32
    %c0_i32_0 = arith.constant 0 : i32
    %c0_i32_1 = arith.constant 0 : i32
    return %c0_i32, %c0_i32_0 : i32, i32
  }
  func.func @transform_3(%arg0: i32) -> (i32, i32) {
    %c0_i32 = arith.constant 0 : i32
    %c0_i32_0 = arith.constant 0 : i32
    %c0_i32_1 = arith.constant 0 : i32
    return %c0_i32, %c0_i32_0 : i32, i32
  }
  func.func @transform_4(%arg0: i32) -> (i32, i32) {
    %c0_i32 = arith.constant 0 : i32
    %c0_i32_0 = arith.constant 0 : i32
    %c0_i32_1 = arith.constant 0 : i32
    return %c0_i32, %c0_i32_0 : i32, i32
  }
  func.func @transform_5(%arg0: i32) -> (i32, i32) {
    %c0_i32 = arith.constant 0 : i32
    %c0_i32_0 = arith.constant 0 : i32
    %c0_i32_1 = arith.constant 0 : i32
    return %c0_i32, %c0_i32_0 : i32, i32
  }
  func.func @transform_6(%arg0: i32) -> (i32, i32) {
    %c0_i32 = arith.constant 0 : i32
    %c0_i32_0 = arith.constant 0 : i32
    %c0_i32_1 = arith.constant 0 : i32
    return %c0_i32, %c0_i32_0 : i32, i32
  }
  func.func @transform_7(%arg0: i32) -> (i32, i32) {
    %c0_i32 = arith.constant 0 : i32
    %c0_i32_0 = arith.constant 0 : i32
    %c0_i32_1 = arith.constant 0 : i32
    return %c0_i32, %c0_i32_0 : i32, i32
  }
  func.func @transform_8(%arg0: i32) -> (i32, i32) {
    %c0_i32 = arith.constant 0 : i32
    %c0_i32_0 = arith.constant 0 : i32
    %c0_i32_1 = arith.constant 0 : i32
    return %c0_i32, %c0_i32_0 : i32, i32
  }
  func.func @transform_9(%arg0: i32) -> (i32, i32) {
    %c0_i32 = arith.constant 0 : i32
    %c0_i32_0 = arith.constant 0 : i32
    return %arg0, %c0_i32 : i32, i32
  }
}

</mosaic_0001>

<llo_original>
// kernel: tpu_custom_call.1
$region0: #{tpu_custom_call.1}
  #allocation0 [shape = 'u32[]', space=smem, size = 0x4, offset = 0x4, fixed_abs, tag = 'smem constant byte address 0x4 - core index']
  #allocation1 [shape = 'u32[144,128]{1,0:T(1,128)}', space=vmem, size = 0x12000, scoped, tag = 'internal scratch']
  %s0 = inlined_call_operand.hbm [shape: f32[16,128], index: 0, kind: input, shape index: {}]
  %s1 = inlined_call_operand.hbm [shape: f32[128,128], index: 1, kind: input, shape index: {}]
  %s2 = inlined_call_operand.vmem [shape: f32[1,128], index: 2, kind: input, shape index: {}]
  %s3 = inlined_call_operand.hbm [shape: f32[128,128], index: 3, kind: input, shape index: {}]
  %s4 = inlined_call_operand.vmem [shape: f32[1,128], index: 4, kind: input, shape index: {}]
  %s5 = inlined_call_operand.hbm [shape: f32[128,128], index: 5, kind: input, shape index: {}]
  %s6 = inlined_call_operand.vmem [shape: f32[1,128], index: 6, kind: input, shape index: {}]
  %s7 = inlined_call_operand.hbm [shape: f32[128,128], index: 7, kind: input, shape index: {}]
  %s8 = inlined_call_operand.vmem [shape: f32[1,128], index: 8, kind: input, shape index: {}]
  %s9 = inlined_call_operand.hbm [shape: f32[16,128], index: 9, kind: output, shape index: {}]
  %s10 = sld [smem:[#allocation0]]
  $region66: #{tpu_custom_call.1} parent=0
    _
  %s12 = ssub.s32 1, %s10
  %s13 = scalar_select 0, %s12, %s10
  $region1: #{tpu_custom_call.1} parent=0
    #allocation2 [shape = 'u8[8192]{0}', space=vmem, size = 0x2000, scoped, tag = 'input window, operand 0, single buffered']
    #allocation3 [shape = 's32[1]{0}', space=sflag, size = 0x4, scoped, tag = 'scoped memory for tpu_custom_call.1']
    #allocation4 [shape = 's32[1]{0}', space=sflag, size = 0x4, scoped, tag = 'scoped memory for tpu_custom_call.1']
    #allocation5 [shape = 'u8[65536]{0}', space=vmem, size = 0x10000, scoped, tag = 'input window, operand 1, single buffered']
    #allocation6 [shape = 's32[1]{0}', space=sflag, size = 0x4, scoped, tag = 'scoped memory for tpu_custom_call.1']
    #allocation7 [shape = 'u8[65536]{0}', space=vmem, size = 0x10000, scoped, tag = 'input window, operand 3, single buffered']
    #allocation8 [shape = 'u8[65536]{0}', space=vmem, size = 0x10000, scoped, tag = 'input window, operand 5, single buffered']
    #allocation9 [shape = 's32[1]{0}', space=sflag, size = 0x4, scoped, tag = 'scoped memory for tpu_custom_call.1']
    #allocation10 [shape = 'u8[65536]{0}', space=vmem, size = 0x10000, scoped, tag = 'input window, operand 7, single buffered']
    #allocation11 [shape = 'u8[8192]{0}', space=vmem, size = 0x2000, scoped, tag = 'output window, operand 0, single buffered']
    %14 = vsyncpa [#allocation3], 0
    %15 = vsyncpa [#allocation6], 0
    %16 = vsyncpa [#allocation9], 0
    %17 = vsyncpa [#allocation4], 0
    // Predicated region
    $region2: #{tpu_custom_call.1} parent=1 // pred_check
      _
    $region3: #{tpu_custom_call.1} parent=1 // pred_check_branch
      %19 = sbr.rel (0) target = $region5
    $region4: #{tpu_custom_call.1} parent=1 // pred_region
      %s21 = ssub.s32 256, 256
      %22 = vsyncadd [#allocation3], %s21
      %s23 = sshll.u32 [#allocation2], 4
      %s24 = int_to_ptr.vmem [resolvable:$true] %s23
      %29 = dma.hbm_to_vmem [thread:$0]  %s0, 256, %s24, [#allocation3], 128, 128, 8
    $region5: #{tpu_custom_call.1} parent=1 // pred_fallthru
      _
    // Predicated region
    $region6: #{tpu_custom_call.1} parent=1 // pred_check
      _
    $region7: #{tpu_custom_call.1} parent=1 // pred_check_branch
      %31 = sbr.rel (0) target = $region9
    $region8: #{tpu_custom_call.1} parent=1 // pred_region
      %s33 = ssub.s32 2048, 2048
      %34 = vsyncadd [#allocation6], %s33
      %s35 = sshll.u32 [#allocation5], 4
      %s36 = int_to_ptr.vmem [resolvable:$true] %s35
      %41 = dma.hbm_to_vmem [thread:$0]  %s1, 2048, %s36, [#allocation6], 128, 128, 8
    $region9: #{tpu_custom_call.1} parent=1 // pred_fallthru
      _
    // Predicated region
    $region10: #{tpu_custom_call.1} parent=1 // pred_check
      _
    $region11: #{tpu_custom_call.1} parent=1 // pred_check_branch
      %43 = sbr.rel (0) target = $region13
    $region12: #{tpu_custom_call.1} parent=1 // pred_region
      _
    $region13: #{tpu_custom_call.1} parent=1 // pred_fallthru
      _
    // Predicated region
    $region14: #{tpu_custom_call.1} parent=1 // pred_check
      _
    $region15: #{tpu_custom_call.1} parent=1 // pred_check_branch
      %45 = sbr.rel (0) target = $region17
    $region16: #{tpu_custom_call.1} parent=1 // pred_region
      %s47 = ssub.s32 2048, 2048
      %48 = vsyncadd [#allocation6], %s47
      %s49 = sshll.u32 [#allocation7], 4
      %s50 = int_to_ptr.vmem [resolvable:$true] %s49
      %55 = dma.hbm_to_vmem [thread:$0]  %s3, 2048, %s50, [#allocation6], 128, 128, 8
    $region17: #{tpu_custom_call.1} parent=1 // pred_fallthru
      _
    // Predicated region
    $region18: #{tpu_custom_call.1} parent=1 // pred_check
      _
    $region19: #{tpu_custom_call.1} parent=1 // pred_check_branch
      %57 = sbr.rel (0) target = $region21
    $region20: #{tpu_custom_call.1} parent=1 // pred_region
      _
    $region21: #{tpu_custom_call.1} parent=1 // pred_fallthru
      _
    // Predicated region
    $region22: #{tpu_custom_call.1} parent=1 // pred_check
      _
    $region23: #{tpu_custom_call.1} parent=1 // pred_check_branch
      %59 = sbr.rel (0) target = $region25
    $region24: #{tpu_custom_call.1} parent=1 // pred_region
      %s61 = ssub.s32 2048, 2048
      %62 = vsyncadd [#allocation9], %s61
      %s63 = sshll.u32 [#allocation8], 4
      %s64 = int_to_ptr.vmem [resolvable:$true] %s63
      %69 = dma.hbm_to_vmem [thread:$0]  %s5, 2048, %s64, [#allocation9], 128, 128, 8
    $region25: #{tpu_custom_call.1} parent=1 // pred_fallthru
      _
    // Predicated region
    $region26: #{tpu_custom_call.1} parent=1 // pred_check
      _
    $region27: #{tpu_custom_call.1} parent=1 // pred_check_branch
      %71 = sbr.rel (0) target = $region29
    $region28: #{tpu_custom_call.1} parent=1 // pred_region
      _
    $region29: #{tpu_custom_call.1} parent=1 // pred_fallthru
      _
    // Predicated region
    $region30: #{tpu_custom_call.1} parent=1 // pred_check
      _
    $region31: #{tpu_custom_call.1} parent=1 // pred_check_branch
      %73 = sbr.rel (0) target = $region33
    $region32: #{tpu_custom_call.1} parent=1 // pred_region
      %s75 = ssub.s32 2048, 2048
      %76 = vsyncadd [#allocation9], %s75
      %s77 = sshll.u32 [#allocation10], 4
      %s78 = int_to_ptr.vmem [resolvable:$true] %s77
      %83 = dma.hbm_to_vmem [thread:$0]  %s7, 2048, %s78, [#allocation9], 128, 128, 8
    $region33: #{tpu_custom_call.1} parent=1 // pred_fallthru
      _
    // Predicated region
    $region34: #{tpu_custom_call.1} parent=1 // pred_check
      _
    $region35: #{tpu_custom_call.1} parent=1 // pred_check_branch
      %85 = sbr.rel (0) target = $region37
    $region36: #{tpu_custom_call.1} parent=1 // pred_region
      _
    $region37: #{tpu_custom_call.1} parent=1 // pred_fallthru
      _
    // Predicated region
    $region38: #{tpu_custom_call.1} parent=1 // pred_check
      _
    $region39: #{tpu_custom_call.1} parent=1 // pred_check_branch
      %87 = sbr.rel (0) target = $region41
    $region40: #{tpu_custom_call.1} parent=1 // pred_region
      %88 = dma.done [#allocation3], 256
    $region41: #{tpu_custom_call.1} parent=1 // pred_fallthru
      _
    // Predicated region
    $region42: #{tpu_custom_call.1} parent=1 // pred_check
      _
    $region43: #{tpu_custom_call.1} parent=1 // pred_check_branch
      %90 = sbr.rel (0) target = $region45
    $region44: #{tpu_custom_call.1} parent=1 // pred_region
      %91 = dma.done [#allocation6], 2048
    $region45: #{tpu_custom_call.1} parent=1 // pred_fallthru
      _
    // Predicated region
    $region46: #{tpu_custom_call.1} parent=1 // pred_check
      _
    $region47: #{tpu_custom_call.1} parent=1 // pred_check_branch
      %93 = sbr.rel (0) target = $region49
    $region48: #{tpu_custom_call.1} parent=1 // pred_region
      %94 = dma.done [#allocation6], 2048
    $region49: #{tpu_custom_call.1} parent=1 // pred_fallthru
      _
    // Predicated region
    $region50: #{tpu_custom_call.1} parent=1 // pred_check
      _
    $region51: #{tpu_custom_call.1} parent=1 // pred_check_branch
      %96 = sbr.rel (0) target = $region53
    $region52: #{tpu_custom_call.1} parent=1 // pred_region
      %97 = dma.done [#allocation9], 2048
    $region53: #{tpu_custom_call.1} parent=1 // pred_fallthru
      _
    // Predicated region
    $region54: #{tpu_custom_call.1} parent=1 // pred_check
      _
    $region55: #{tpu_custom_call.1} parent=1 // pred_check_branch
      %99 = sbr.rel (0) target = $region57
    $region56: #{tpu_custom_call.1} parent=1 // pred_region
      %100 = dma.done [#allocation9], 2048
    $region57: #{tpu_custom_call.1} parent=1 // pred_fallthru
      _
    %v101 = vld [vmem:[#allocation2] sm:$0xff]
    %v102 = vld [vmem:[#allocation2 + $0x8] sm:$0xff]
    %v103 = vld [vmem:[#allocation5] sm:$0xff]
    %v104 = vld [vmem:[#allocation5 + $0x8] sm:$0xff]
    %v105 = vld [vmem:[#allocation5 + $0x10] sm:$0xff]
    %v106 = vld [vmem:[#allocation5 + $0x18] sm:$0xff]
    %v107 = vld [vmem:[#allocation5 + $0x20] sm:$0xff]
    %v108 = vld [vmem:[#allocation5 + $0x28] sm:$0xff]
    %v109 = vld [vmem:[#allocation5 + $0x30] sm:$0xff]
    %v110 = vld [vmem:[#allocation5 + $0x38] sm:$0xff]
    %v111 = vld [vmem:[#allocation5 + $0x40] sm:$0xff]
    %v112 = vld [vmem:[#allocation5 + $0x48] sm:$0xff]
    %v113 = vld [vmem:[#allocation5 + $0x50] sm:$0xff]
    %v114 = vld [vmem:[#allocation5 + $0x58] sm:$0xff]
    %v115 = vld [vmem:[#allocation5 + $0x60] sm:$0xff]
    %v116 = vld [vmem:[#allocation5 + $0x68] sm:$0xff]
    %v117 = vld [vmem:[#allocation5 + $0x70] sm:$0xff]
    %v118 = vld [vmem:[#allocation5 + $0x78] sm:$0xff]
    %v119 = vld [vmem:[%s2] sm:$0x1]
    %v121 = vlaneseq
    %v122 = vshrl.u32 %v121, 7
    %v123 = vsub.s32 0, %v122
    %v124 = vrot.slane %v119, %v123
    %126 = vmatprep.subr.mxu0 0.0
    %127 = vmatpush1.msra.mxu0 %v118
    %128 = vmatprep.subr.mxu0 0.0
    %129 = vmatpush1.msra.mxu0 %v117
    %130 = vmatprep.subr.mxu0 0.0
    %131 = vmatpush1.msra.mxu0 %v116
    %132 = vmatprep.subr.mxu0 0.0
    %133 = vmatpush1.msra.mxu0 %v115
    %134 = vmatprep.subr.mxu0 0.0
    %135 = vmatpush1.msra.mxu0 %v114
    %136 = vmatprep.subr.mxu0 0.0
    %137 = vmatpush1.msra.mxu0 %v113
    %138 = vmatprep.subr.mxu0 0.0
    %139 = vmatpush1.msra.mxu0 %v112
    %140 = vmatprep.subr.mxu0 0.0
    %141 = vmatpush1.msra.mxu0 %v111
    %142 = vmatprep.subr.mxu0 0.0
    %143 = vmatpush1.msra.mxu0 %v110
    %144 = vmatprep.subr.mxu0 0.0
    %145 = vmatpush1.msra.mxu0 %v109
    %146 = vmatprep.subr.mxu0 0.0
    %147 = vmatpush1.msra.mxu0 %v108
    %148 = vmatprep.subr.mxu0 0.0
    %149 = vmatpush1.msra.mxu0 %v107
    %150 = vmatprep.subr.mxu0 0.0
    %151 = vmatpush1.msra.mxu0 %v106
    %152 = vmatprep.subr.mxu0 0.0
    %153 = vmatpush1.msra.mxu0 %v105
    %154 = vmatprep.subr.mxu0 0.0
    %155 = vmatpush1.msra.mxu0 %v104
    %156 = vmatprep.subr.mxu0 0.0
    %157 = vmatpush1.msra.mxu0 %v103
    %158 = vmatprep.subr.mxu0 0.0
    %159 = vmatpush2.msra.mxu0 0.0
    %160 = vmatprep.subr.mxu0 0.0
    %161 = vmatpush2.msra.mxu0 0.0
    %162 = vmatprep.subr.mxu0 0.0
    %163 = vmatpush2.msra.mxu0 0.0
    %164 = vmatprep.subr.mxu0 0.0
    %165 = vmatpush2.msra.mxu0 0.0
    %166 = vmatprep.subr.mxu0 0.0
    %167 = vmatpush2.msra.mxu0 0.0
    %168 = vmatprep.subr.mxu0 0.0
    %169 = vmatpush2.msra.mxu0 0.0
    %170 = vmatprep.subr.mxu0 0.0
    %171 = vmatpush2.msra.mxu0 0.0
    %172 = vmatprep.subr.mxu0 0.0
    %173 = vmatpush2.msra.mxu0 0.0
    %174 = vmatprep.subr.mxu0 0.0
    %175 = vmatpush2.msra.mxu0 0.0
    %176 = vmatprep.subr.mxu0 0.0
    %177 = vmatpush2.msra.mxu0 0.0
    %178 = vmatprep.subr.mxu0 0.0
    %179 = vmatpush2.msra.mxu0 0.0
    %180 = vmatprep.subr.mxu0 0.0
    %181 = vmatpush2.msra.mxu0 0.0
    %182 = vmatprep.subr.mxu0 0.0
    %183 = vmatpush2.msra.mxu0 0.0
    %184 = vmatprep.subr.mxu0 0.0
    %185 = vmatpush2.msra.mxu0 0.0
    %186 = vmatprep.subr.mxu0 0.0
    %187 = vmatpush2.msra.mxu0 0.0
    %188 = vmatprep.subr.mxu0 0.0
    %189 = vmatpush2.msra.mxu0 0.0
    %190 = vmatprep.mubr.f32.mxu0 0.0
    %191 = vmatmul.mubr.f32.gmra.mxu0 %v101
    %v192 = vpop.f32.mrf.mxu0
    %v193 = vadd.f32 %v124, %v192
    %v194 = vpop.f32.mrf.mxu0
    %195 = vmatprep.mubr.f32.mxu0 0.0
    %196 = vmatmul.mubr.f32.gmra.mxu0 %v102
    %v197 = vpop.f32.mrf.mxu0
    %v198 = vadd.f32 %v124, %v197
    %v199 = vpop.f32.mrf.mxu0
    %200 = vdwg.mxu0
    %v201 = vld [vmem:[#allocation7] sm:$0xff]
    %v202 = vld [vmem:[#allocation7 + $0x8] sm:$0xff]
    %v203 = vld [vmem:[#allocation7 + $0x10] sm:$0xff]
    %v204 = vld [vmem:[#allocation7 + $0x18] sm:$0xff]
    %v205 = vld [vmem:[#allocation7 + $0x20] sm:$0xff]
    %v206 = vld [vmem:[#allocation7 + $0x28] sm:$0xff]
    %v207 = vld [vmem:[#allocation7 + $0x30] sm:$0xff]
    %v208 = vld [vmem:[#allocation7 + $0x38] sm:$0xff]
    %v209 = vld [vmem:[#allocation7 + $0x40] sm:$0xff]
    %v210 = vld [vmem:[#allocation7 + $0x48] sm:$0xff]
    %v211 = vld [vmem:[#allocation7 + $0x50] sm:$0xff]
    %v212 = vld [vmem:[#allocation7 + $0x58] sm:$0xff]
    %v213 = vld [vmem:[#allocation7 + $0x60] sm:$0xff]
    %v214 = vld [vmem:[#allocation7 + $0x68] sm:$0xff]
    %v215 = vld [vmem:[#allocation7 + $0x70] sm:$0xff]
    %v216 = vld [vmem:[#allocation7 + $0x78] sm:$0xff]
    %v217 = vld [vmem:[%s4] sm:$0x1]
    %v219 = vlaneseq
    %v220 = vshrl.u32 %v219, 7
    %v221 = vsub.s32 0, %v220
    %v222 = vrot.slane %v217, %v221
    %224 = vmatprep.subr.mxu0 0.0
    %225 = vmatpush1.msra.mxu0 %v216
    %226 = vmatprep.subr.mxu0 0.0
    %227 = vmatpush1.msra.mxu0 %v215
    %228 = vmatprep.subr.mxu0 0.0
    %229 = vmatpush1.msra.mxu0 %v214
    %230 = vmatprep.subr.mxu0 0.0
    %231 = vmatpush1.msra.mxu0 %v213
    %232 = vmatprep.subr.mxu0 0.0
    %233 = vmatpush1.msra.mxu0 %v212
    %234 = vmatprep.subr.mxu0 0.0
    %235 = vmatpush1.msra.mxu0 %v211
    %236 = vmatprep.subr.mxu0 0.0
    %237 = vmatpush1.msra.mxu0 %v210
    %238 = vmatprep.subr.mxu0 0.0
    %239 = vmatpush1.msra.mxu0 %v209
    %240 = vmatprep.subr.mxu0 0.0
    %241 = vmatpush1.msra.mxu0 %v208
    %242 = vmatprep.subr.mxu0 0.0
    %243 = vmatpush1.msra.mxu0 %v207
    %244 = vmatprep.subr.mxu0 0.0
    %245 = vmatpush1.msra.mxu0 %v206
    %246 = vmatprep.subr.mxu0 0.0
    %247 = vmatpush1.msra.mxu0 %v205
    %248 = vmatprep.subr.mxu0 0.0
    %249 = vmatpush1.msra.mxu0 %v204
    %250 = vmatprep.subr.mxu0 0.0
    %251 = vmatpush1.msra.mxu0 %v203
    %252 = vmatprep.subr.mxu0 0.0
    %253 = vmatpush1.msra.mxu0 %v202
    %254 = vmatprep.subr.mxu0 0.0
    %255 = vmatpush1.msra.mxu0 %v201
    %256 = vmatprep.subr.mxu0 0.0
    %257 = vmatpush2.msra.mxu0 0.0
    %258 = vmatprep.subr.mxu0 0.0
    %259 = vmatpush2.msra.mxu0 0.0
    %260 = vmatprep.subr.mxu0 0.0
    %261 = vmatpush2.msra.mxu0 0.0
    %262 = vmatprep.subr.mxu0 0.0
    %263 = vmatpush2.msra.mxu0 0.0
    %264 = vmatprep.subr.mxu0 0.0
    %265 = vmatpush2.msra.mxu0 0.0
    %266 = vmatprep.subr.mxu0 0.0
    %267 = vmatpush2.msra.mxu0 0.0
    %268 = vmatprep.subr.mxu0 0.0
    %269 = vmatpush2.msra.mxu0 0.0
    %270 = vmatprep.subr.mxu0 0.0
    %271 = vmatpush2.msra.mxu0 0.0
    %272 = vmatprep.subr.mxu0 0.0
    %273 = vmatpush2.msra.mxu0 0.0
    %274 = vmatprep.subr.mxu0 0.0
    %275 = vmatpush2.msra.mxu0 0.0
    %276 = vmatprep.subr.mxu0 0.0
    %277 = vmatpush2.msra.mxu0 0.0
    %278 = vmatprep.subr.mxu0 0.0
    %279 = vmatpush2.msra.mxu0 0.0
    %280 = vmatprep.subr.mxu0 0.0
    %281 = vmatpush2.msra.mxu0 0.0
    %282 = vmatprep.subr.mxu0 0.0
    %283 = vmatpush2.msra.mxu0 0.0
    %284 = vmatprep.subr.mxu0 0.0
    %285 = vmatpush2.msra.mxu0 0.0
    %286 = vmatprep.subr.mxu0 0.0
    %287 = vmatpush2.msra.mxu0 0.0
    %288 = vmatprep.mubr.f32.mxu0 0.0
    %289 = vmatmul.mubr.f32.gmra.mxu0 %v193
    %v290 = vpop.f32.mrf.mxu0
    %v291 = vadd.f32 %v222, %v290
    %v292 = vpop.f32.mrf.mxu0
    %293 = vmatprep.mubr.f32.mxu0 0.0
    %294 = vmatmul.mubr.f32.gmra.mxu0 %v198
    %v295 = vpop.f32.mrf.mxu0
    %v296 = vadd.f32 %v222, %v295
    %v297 = vpop.f32.mrf.mxu0
    %298 = vdwg.mxu0
    %v299 = vmul.f32 %v291, 0.5
    %v300 = vmul.f32 %v296, 0.5
    %v301 = vmul.f32 %v291, 0.70710677
    %v302 = vmul.f32 %v296, 0.70710677
    %v303 = verf.f32.pop %v301
    %v304 = verf.f32.pop %v302
    %v305 = vadd.f32 %v303, 1.0
    %v306 = vadd.f32 %v304, 1.0
    %v307 = vmul.f32 %v299, %v305
    %v308 = vmul.f32 %v300, %v306
    %v309 = vld [vmem:[#allocation8] sm:$0xff]
    %v310 = vld [vmem:[#allocation8 + $0x8] sm:$0xff]
    %v311 = vld [vmem:[#allocation8 + $0x10] sm:$0xff]
    %v312 = vld [vmem:[#allocation8 + $0x18] sm:$0xff]
    %v313 = vld [vmem:[#allocation8 + $0x20] sm:$0xff]
    %v314 = vld [vmem:[#allocation8 + $0x28] sm:$0xff]
    %v315 = vld [vmem:[#allocation8 + $0x30] sm:$0xff]
    %v316 = vld [vmem:[#allocation8 + $0x38] sm:$0xff]
    %v317 = vld [vmem:[#allocation8 + $0x40] sm:$0xff]
    %v318 = vld [vmem:[#allocation8 + $0x48] sm:$0xff]
    %v319 = vld [vmem:[#allocation8 + $0x50] sm:$0xff]
    %v320 = vld [vmem:[#allocation8 + $0x58] sm:$0xff]
    %v321 = vld [vmem:[#allocation8 + $0x60] sm:$0xff]
    %v322 = vld [vmem:[#allocation8 + $0x68] sm:$0xff]
    %v323 = vld [vmem:[#allocation8 + $0x70] sm:$0xff]
    %v324 = vld [vmem:[#allocation8 + $0x78] sm:$0xff]
    %v325 = vld [vmem:[%s6] sm:$0x1]
    %v327 = vlaneseq
    %v328 = vshrl.u32 %v327, 7
    %v329 = vsub.s32 0, %v328
    %v330 = vrot.slane %v325, %v329
    %332 = vmatprep.subr.mxu0 0.0
    %333 = vmatpush1.msra.mxu0 %v324
    %334 = vmatprep.subr.mxu0 0.0
    %335 = vmatpush1.msra.mxu0 %v323
    %336 = vmatprep.subr.mxu0 0.0
    %337 = vmatpush1.msra.mxu0 %v322
    %338 = vmatprep.subr.mxu0 0.0
    %339 = vmatpush1.msra.mxu0 %v321
    %340 = vmatprep.subr.mxu0 0.0
    %341 = vmatpush1.msra.mxu0 %v320
    %342 = vmatprep.subr.mxu0 0.0
    %343 = vmatpush1.msra.mxu0 %v319
    %344 = vmatprep.subr.mxu0 0.0
    %345 = vmatpush1.msra.mxu0 %v318
    %346 = vmatprep.subr.mxu0 0.0
    %347 = vmatpush1.msra.mxu0 %v317
    %348 = vmatprep.subr.mxu0 0.0
    %349 = vmatpush1.msra.mxu0 %v316
    %350 = vmatprep.subr.mxu0 0.0
    %351 = vmatpush1.msra.mxu0 %v315
    %352 = vmatprep.subr.mxu0 0.0
    %353 = vmatpush1.msra.mxu0 %v314
    %354 = vmatprep.subr.mxu0 0.0
    %355 = vmatpush1.msra.mxu0 %v313
    %356 = vmatprep.subr.mxu0 0.0
    %357 = vmatpush1.msra.mxu0 %v312
    %358 = vmatprep.subr.mxu0 0.0
    %359 = vmatpush1.msra.mxu0 %v311
    %360 = vmatprep.subr.mxu0 0.0
    %361 = vmatpush1.msra.mxu0 %v310
    %362 = vmatprep.subr.mxu0 0.0
    %363 = vmatpush1.msra.mxu0 %v309
    %364 = vmatprep.subr.mxu0 0.0
    %365 = vmatpush2.msra.mxu0 0.0
    %366 = vmatprep.subr.mxu0 0.0
    %367 = vmatpush2.msra.mxu0 0.0
    %368 = vmatprep.subr.mxu0 0.0
    %369 = vmatpush2.msra.mxu0 0.0
    %370 = vmatprep.subr.mxu0 0.0
    %371 = vmatpush2.msra.mxu0 0.0
    %372 = vmatprep.subr.mxu0 0.0
    %373 = vmatpush2.msra.mxu0 0.0
    %374 = vmatprep.subr.mxu0 0.0
    %375 = vmatpush2.msra.mxu0 0.0
    %376 = vmatprep.subr.mxu0 0.0
    %377 = vmatpush2.msra.mxu0 0.0
    %378 = vmatprep.subr.mxu0 0.0
    %379 = vmatpush2.msra.mxu0 0.0
    %380 = vmatprep.subr.mxu0 0.0
    %381 = vmatpush2.msra.mxu0 0.0
    %382 = vmatprep.subr.mxu0 0.0
    %383 = vmatpush2.msra.mxu0 0.0
    %384 = vmatprep.subr.mxu0 0.0
    %385 = vmatpush2.msra.mxu0 0.0
    %386 = vmatprep.subr.mxu0 0.0
    %387 = vmatpush2.msra.mxu0 0.0
    %388 = vmatprep.subr.mxu0 0.0
    %389 = vmatpush2.msra.mxu0 0.0
    %390 = vmatprep.subr.mxu0 0.0
    %391 = vmatpush2.msra.mxu0 0.0
    %392 = vmatprep.subr.mxu0 0.0
    %393 = vmatpush2.msra.mxu0 0.0
    %394 = vmatprep.subr.mxu0 0.0
    %395 = vmatpush2.msra.mxu0 0.0
    %396 = vmatprep.mubr.f32.mxu0 0.0
    %397 = vmatmul.mubr.f32.gmra.mxu0 %v307
    %v398 = vpop.f32.mrf.mxu0
    %v399 = vadd.f32 %v330, %v398
    %v400 = vpop.f32.mrf.mxu0
    %401 = vmatprep.mubr.f32.mxu0 0.0
    %402 = vmatmul.mubr.f32.gmra.mxu0 %v308
    %v403 = vpop.f32.mrf.mxu0
    %v404 = vadd.f32 %v330, %v403
    %v405 = vpop.f32.mrf.mxu0
    %406 = vdwg.mxu0
    %v407 = vmul.f32 %v399, 0.5
    %v408 = vmul.f32 %v404, 0.5
    %v409 = vmul.f32 %v399, 0.70710677
    %v410 = vmul.f32 %v404, 0.70710677
    %v411 = verf.f32.pop %v409
    %v412 = verf.f32.pop %v410
    %v413 = vadd.f32 %v411, 1.0
    %v414 = vadd.f32 %v412, 1.0
    %v415 = vmul.f32 %v407, %v413
    %v416 = vmul.f32 %v408, %v414
    %v417 = vld [vmem:[#allocation10] sm:$0xff]
    %v418 = vld [vmem:[#allocation10 + $0x8] sm:$0xff]
    %v419 = vld [vmem:[#allocation10 + $0x10] sm:$0xff]
    %v420 = vld [vmem:[#allocation10 + $0x18] sm:$0xff]
    %v421 = vld [vmem:[#allocation10 + $0x20] sm:$0xff]
    %v422 = vld [vmem:[#allocation10 + $0x28] sm:$0xff]
    %v423 = vld [vmem:[#allocation10 + $0x30] sm:$0xff]
    %v424 = vld [vmem:[#allocation10 + $0x38] sm:$0xff]
    %v425 = vld [vmem:[#allocation10 + $0x40] sm:$0xff]
    %v426 = vld [vmem:[#allocation10 + $0x48] sm:$0xff]
    %v427 = vld [vmem:[#allocation10 + $0x50] sm:$0xff]
    %v428 = vld [vmem:[#allocation10 + $0x58] sm:$0xff]
    %v429 = vld [vmem:[#allocation10 + $0x60] sm:$0xff]
    %v430 = vld [vmem:[#allocation10 + $0x68] sm:$0xff]
    %v431 = vld [vmem:[#allocation10 + $0x70] sm:$0xff]
    %v432 = vld [vmem:[#allocation10 + $0x78] sm:$0xff]
    %v433 = vld [vmem:[%s8] sm:$0x1]
    %v435 = vlaneseq
    %v436 = vshrl.u32 %v435, 7
    %v437 = vsub.s32 0, %v436
    %v438 = vrot.slane %v433, %v437
    %440 = vmatprep.subr.mxu0 0.0
    %441 = vmatpush1.msra.mxu0 %v432
    %442 = vmatprep.subr.mxu0 0.0
    %443 = vmatpush1.msra.mxu0 %v431
    %444 = vmatprep.subr.mxu0 0.0
    %445 = vmatpush1.msra.mxu0 %v430
    %446 = vmatprep.subr.mxu0 0.0
    %447 = vmatpush1.msra.mxu0 %v429
    %448 = vmatprep.subr.mxu0 0.0
    %449 = vmatpush1.msra.mxu0 %v428
    %450 = vmatprep.subr.mxu0 0.0
    %451 = vmatpush1.msra.mxu0 %v427
    %452 = vmatprep.subr.mxu0 0.0
    %453 = vmatpush1.msra.mxu0 %v426
    %454 = vmatprep.subr.mxu0 0.0
    %455 = vmatpush1.msra.mxu0 %v425
    %456 = vmatprep.subr.mxu0 0.0
    %457 = vmatpush1.msra.mxu0 %v424
    %458 = vmatprep.subr.mxu0 0.0
    %459 = vmatpush1.msra.mxu0 %v423
    %460 = vmatprep.subr.mxu0 0.0
    %461 = vmatpush1.msra.mxu0 %v422
    %462 = vmatprep.subr.mxu0 0.0
    %463 = vmatpush1.msra.mxu0 %v421
    %464 = vmatprep.subr.mxu0 0.0
    %465 = vmatpush1.msra.mxu0 %v420
    %466 = vmatprep.subr.mxu0 0.0
    %467 = vmatpush1.msra.mxu0 %v419
    %468 = vmatprep.subr.mxu0 0.0
    %469 = vmatpush1.msra.mxu0 %v418
    %470 = vmatprep.subr.mxu0 0.0
    %471 = vmatpush1.msra.mxu0 %v417
    %472 = vmatprep.subr.mxu0 0.0
    %473 = vmatpush2.msra.mxu0 0.0
    %474 = vmatprep.subr.mxu0 0.0
    %475 = vmatpush2.msra.mxu0 0.0
    %476 = vmatprep.subr.mxu0 0.0
    %477 = vmatpush2.msra.mxu0 0.0
    %478 = vmatprep.subr.mxu0 0.0
    %479 = vmatpush2.msra.mxu0 0.0
    %480 = vmatprep.subr.mxu0 0.0
    %481 = vmatpush2.msra.mxu0 0.0
    %482 = vmatprep.subr.mxu0 0.0
    %483 = vmatpush2.msra.mxu0 0.0
    %484 = vmatprep.subr.mxu0 0.0
    %485 = vmatpush2.msra.mxu0 0.0
    %486 = vmatprep.subr.mxu0 0.0
    %487 = vmatpush2.msra.mxu0 0.0
    %488 = vmatprep.subr.mxu0 0.0
    %489 = vmatpush2.msra.mxu0 0.0
    %490 = vmatprep.subr.mxu0 0.0
    %491 = vmatpush2.msra.mxu0 0.0
    %492 = vmatprep.subr.mxu0 0.0
    %493 = vmatpush2.msra.mxu0 0.0
    %494 = vmatprep.subr.mxu0 0.0
    %495 = vmatpush2.msra.mxu0 0.0
    %496 = vmatprep.subr.mxu0 0.0
    %497 = vmatpush2.msra.mxu0 0.0
    %498 = vmatprep.subr.mxu0 0.0
    %499 = vmatpush2.msra.mxu0 0.0
    %500 = vmatprep.subr.mxu0 0.0
    %501 = vmatpush2.msra.mxu0 0.0
    %502 = vmatprep.subr.mxu0 0.0
    %503 = vmatpush2.msra.mxu0 0.0
    %504 = vmatprep.mubr.f32.mxu0 0.0
    %505 = vmatmul.mubr.f32.gmra.mxu0 %v415
    %v506 = vpop.f32.mrf.mxu0
    %v507 = vadd.f32 %v438, %v506
    %v508 = vpop.f32.mrf.mxu0
    %509 = vmatprep.mubr.f32.mxu0 0.0
    %510 = vmatmul.mubr.f32.gmra.mxu0 %v416
    %v511 = vpop.f32.mrf.mxu0
    %v512 = vadd.f32 %v438, %v511
    %v513 = vpop.f32.mrf.mxu0
    %514 = vdwg.mxu0
    %515 = vst [vmem:[#allocation11] sm:$0xff] %v507
    %516 = vst [vmem:[#allocation11 + $0x8] sm:$0xff] %v512
    // Predicated region
    $region58: #{tpu_custom_call.1} parent=1 // pred_check
      _
    $region59: #{tpu_custom_call.1} parent=1 // pred_check_branch
      %518 = sbr.rel (0) target = $region61
    $region60: #{tpu_custom_call.1} parent=1 // pred_region
      %s520 = ssub.s32 256, 256
      %521 = vsyncadd [#allocation4], %s520
      %s522 = sshll.u32 [#allocation11], 4
      %s523 = int_to_ptr.vmem [resolvable:$true] %s522
      %528 = dma.vmem_to_hbm [thread:$0]  %s523, 256, %s9, [#allocation4], 128, 128, 8
    $region61: #{tpu_custom_call.1} parent=1 // pred_fallthru
      _
    // Predicated region
    $region62: #{tpu_custom_call.1} parent=1 // pred_check
      _
    $region63: #{tpu_custom_call.1} parent=1 // pred_check_branch
      %530 = sbr.rel (0) target = $region65
    $region64: #{tpu_custom_call.1} parent=1 // pred_region
      %531 = dma.done [#allocation4], 256
    $region65: #{tpu_custom_call.1} parent=1 // pred_fallthru
      _
    %532 = vsyncpa [#allocation3], 1
    %533 = vsyncpa [#allocation6], 1
    %534 = vsyncpa [#allocation9], 1
    %535 = vsyncpa [#allocation4], 1

// kernel: tpu_custom_call.1
$region0: #{tpu_custom_call.1}
  #allocation0 [shape = 'u32[]', space=smem, size = 0x4, offset = 0x4, fixed_abs, tag = 'smem constant byte address 0x4 - core index']
  #allocation1 [shape = 'u32[144,128]{1,0:T(1,128)}', space=vmem, size = 0x12000, scoped, tag = 'internal scratch']
  %s0 = inlined_call_operand.hbm [shape: f32[16,128], index: 0, kind: input, shape index: {}]
  %s1 = inlined_call_operand.hbm [shape: f32[128,128], index: 1, kind: input, shape index: {}]
  %s2 = inlined_call_operand.vmem [shape: f32[1,128], index: 2, kind: input, shape index: {}]
  %s3 = inlined_call_operand.hbm [shape: f32[128,128], index: 3, kind: input, shape index: {}]
  %s4 = inlined_call_operand.vmem [shape: f32[1,128], index: 4, kind: input, shape index: {}]
  %s5 = inlined_call_operand.hbm [shape: f32[128,128], index: 5, kind: input, shape index: {}]
  %s6 = inlined_call_operand.vmem [shape: f32[1,128], index: 6, kind: input, shape index: {}]
  %s7 = inlined_call_operand.hbm [shape: f32[128,128], index: 7, kind: input, shape index: {}]
  %s8 = inlined_call_operand.vmem [shape: f32[1,128], index: 8, kind: input, shape index: {}]
  %s9 = inlined_call_operand.hbm [shape: f32[16,128], index: 9, kind: output, shape index: {}]
  %s10 = sld [smem:[#allocation0]]
  $region66: #{tpu_custom_call.1} parent=0
    _
  %s12 = ssub.s32 1, %s10
  %s13 = scalar_select 0, %s12, %s10
  $region1: #{tpu_custom_call.1} parent=0
    #allocation2 [shape = 'u8[8192]{0}', space=vmem, size = 0x2000, scoped, tag = 'input window, operand 0, single buffered']
    #allocation3 [shape = 's32[1]{0}', space=sflag, size = 0x4, scoped, tag = 'scoped memory for tpu_custom_call.1']
    #allocation4 [shape = 's32[1]{0}', space=sflag, size = 0x4, scoped, tag = 'scoped memory for tpu_custom_call.1']
    #allocation5 [shape = 'u8[65536]{0}', space=vmem, size = 0x10000, scoped, tag = 'input window, operand 1, single buffered']
    #allocation6 [shape = 's32[1]{0}', space=sflag, size = 0x4, scoped, tag = 'scoped memory for tpu_custom_call.1']
    #allocation7 [shape = 'u8[65536]{0}', space=vmem, size = 0x10000, scoped, tag = 'input window, operand 3, single buffered']
    #allocation8 [shape = 'u8[65536]{0}', space=vmem, size = 0x10000, scoped, tag = 'input window, operand 5, single buffered']
    #allocation9 [shape = 's32[1]{0}', space=sflag, size = 0x4, scoped, tag = 'scoped memory for tpu_custom_call.1']
    #allocation10 [shape = 'u8[65536]{0}', space=vmem, size = 0x10000, scoped, tag = 'input window, operand 7, single buffered']
    #allocation11 [shape = 'u8[8192]{0}', space=vmem, size = 0x2000, scoped, tag = 'output window, operand 0, single buffered']
    %14 = vsyncpa [#allocation3], 0
    %15 = vsyncpa [#allocation6], 0
    %16 = vsyncpa [#allocation9], 0
    %17 = vsyncpa [#allocation4], 0
    // Predicated region
    $region2: #{tpu_custom_call.1} parent=1 // pred_check
      _
    $region3: #{tpu_custom_call.1} parent=1 // pred_check_branch
      %19 = sbr.rel (0) target = $region5
    $region4: #{tpu_custom_call.1} parent=1 // pred_region
      %s21 = ssub.s32 256, 256
      %22 = vsyncadd [#allocation3], %s21
      %s23 = sshll.u32 [#allocation2], 4
      %s24 = int_to_ptr.vmem [resolvable:$true] %s23
      %29 = dma.hbm_to_vmem [thread:$0]  %s0, 256, %s24, [#allocation3], 128, 128, 8
    $region5: #{tpu_custom_call.1} parent=1 // pred_fallthru
      _
    // Predicated region
    $region6: #{tpu_custom_call.1} parent=1 // pred_check
      _
    $region7: #{tpu_custom_call.1} parent=1 // pred_check_branch
      %31 = sbr.rel (0) target = $region9
    $region8: #{tpu_custom_call.1} parent=1 // pred_region
      %s33 = ssub.s32 2048, 2048
      %34 = vsyncadd [#allocation6], %s33
      %s35 = sshll.u32 [#allocation5], 4
      %s36 = int_to_ptr.vmem [resolvable:$true] %s35
      %41 = dma.hbm_to_vmem [thread:$0]  %s1, 2048, %s36, [#allocation6], 128, 128, 8
    $region9: #{tpu_custom_call.1} parent=1 // pred_fallthru
      _
    // Predicated region
    $region10: #{tpu_custom_call.1} parent=1 // pred_check
      _
    $region11: #{tpu_custom_call.1} parent=1 // pred_check_branch
      %43 = sbr.rel (0) target = $region13
    $region12: #{tpu_custom_call.1} parent=1 // pred_region
      _
    $region13: #{tpu_custom_call.1} parent=1 // pred_fallthru
      _
    // Predicated region
    $region14: #{tpu_custom_call.1} parent=1 // pred_check
      _
    $region15: #{tpu_custom_call.1} parent=1 // pred_check_branch
      %45 = sbr.rel (0) target = $region17
    $region16: #{tpu_custom_call.1} parent=1 // pred_region
      %s47 = ssub.s32 2048, 2048
      %48 = vsyncadd [#allocation6], %s47
      %s49 = sshll.u32 [#allocation7], 4
      %s50 = int_to_ptr.vmem [resolvable:$true] %s49
      %55 = dma.hbm_to_vmem [thread:$0]  %s3, 2048, %s50, [#allocation6], 128, 128, 8
    $region17: #{tpu_custom_call.1} parent=1 // pred_fallthru
      _
    // Predicated region
    $region18: #{tpu_custom_call.1} parent=1 // pred_check
      _
    $region19: #{tpu_custom_call.1} parent=1 // pred_check_branch
      %57 = sbr.rel (0) target = $region21
    $region20: #{tpu_custom_call.1} parent=1 // pred_region
      _
    $region21: #{tpu_custom_call.1} parent=1 // pred_fallthru
      _
    // Predicated region
    $region22: #{tpu_custom_call.1} parent=1 // pred_check
      _
    $region23: #{tpu_custom_call.1} parent=1 // pred_check_branch
      %59 = sbr.rel (0) target = $region25
    $region24: #{tpu_custom_call.1} parent=1 // pred_region
      %s61 = ssub.s32 2048, 2048
      %62 = vsyncadd [#allocation9], %s61
      %s63 = sshll.u32 [#allocation8], 4
      %s64 = int_to_ptr.vmem [resolvable:$true] %s63
      %69 = dma.hbm_to_vmem [thread:$0]  %s5, 2048, %s64, [#allocation9], 128, 128, 8
    $region25: #{tpu_custom_call.1} parent=1 // pred_fallthru
      _
    // Predicated region
    $region26: #{tpu_custom_call.1} parent=1 // pred_check
      _
    $region27: #{tpu_custom_call.1} parent=1 // pred_check_branch
      %71 = sbr.rel (0) target = $region29
    $region28: #{tpu_custom_call.1} parent=1 // pred_region
      _
    $region29: #{tpu_custom_call.1} parent=1 // pred_fallthru
      _
    // Predicated region
    $region30: #{tpu_custom_call.1} parent=1 // pred_check
      _
    $region31: #{tpu_custom_call.1} parent=1 // pred_check_branch
      %73 = sbr.rel (0) target = $region33
    $region32: #{tpu_custom_call.1} parent=1 // pred_region
      %s75 = ssub.s32 2048, 2048
      %76 = vsyncadd [#allocation9], %s75
      %s77 = sshll.u32 [#allocation10], 4
      %s78 = int_to_ptr.vmem [resolvable:$true] %s77
      %83 = dma.hbm_to_vmem [thread:$0]  %s7, 2048, %s78, [#allocation9], 128, 128, 8
    $region33: #{tpu_custom_call.1} parent=1 // pred_fallthru
      _
    // Predicated region
    $region34: #{tpu_custom_call.1} parent=1 // pred_check
      _
    $region35: #{tpu_custom_call.1} parent=1 // pred_check_branch
      %85 = sbr.rel (0) target = $region37
    $region36: #{tpu_custom_call.1} parent=1 // pred_region
      _
    $region37: #{tpu_custom_call.1} parent=1 // pred_fallthru
      _
    // Predicated region
    $region38: #{tpu_custom_call.1} parent=1 // pred_check
      _
    $region39: #{tpu_custom_call.1} parent=1 // pred_check_branch
      %87 = sbr.rel (0) target = $region41
    $region40: #{tpu_custom_call.1} parent=1 // pred_region
      %88 = dma.done [#allocation3], 256
    $region41: #{tpu_custom_call.1} parent=1 // pred_fallthru
      _
    // Predicated region
    $region42: #{tpu_custom_call.1} parent=1 // pred_check
      _
    $region43: #{tpu_custom_call.1} parent=1 // pred_check_branch
      %90 = sbr.rel (0) target = $region45
    $region44: #{tpu_custom_call.1} parent=1 // pred_region
      %91 = dma.done [#allocation6], 2048
    $region45: #{tpu_custom_call.1} parent=1 // pred_fallthru
      _
    // Predicated region
    $region46: #{tpu_custom_call.1} parent=1 // pred_check
      _
    $region47: #{tpu_custom_call.1} parent=1 // pred_check_branch
      %93 = sbr.rel (0) target = $region49
    $region48: #{tpu_custom_call.1} parent=1 // pred_region
      %94 = dma.done [#allocation6], 2048
    $region49: #{tpu_custom_call.1} parent=1 // pred_fallthru
      _
    // Predicated region
    $region50: #{tpu_custom_call.1} parent=1 // pred_check
      _
    $region51: #{tpu_custom_call.1} parent=1 // pred_check_branch
      %96 = sbr.rel (0) target = $region53
    $region52: #{tpu_custom_call.1} parent=1 // pred_region
      %97 = dma.done [#allocation9], 2048
    $region53: #{tpu_custom_call.1} parent=1 // pred_fallthru
      _
    // Predicated region
    $region54: #{tpu_custom_call.1} parent=1 // pred_check
      _
    $region55: #{tpu_custom_call.1} parent=1 // pred_check_branch
      %99 = sbr.rel (0) target = $region57
    $region56: #{tpu_custom_call.1} parent=1 // pred_region
      %100 = dma.done [#allocation9], 2048
    $region57: #{tpu_custom_call.1} parent=1 // pred_fallthru
      _
    %v101 = vld [vmem:[#allocation2] sm:$0xff]
    %v102 = vld [vmem:[#allocation2 + $0x8] sm:$0xff]
    %v103 = vld [vmem:[#allocation5] sm:$0xff]
    %v104 = vld [vmem:[#allocation5 + $0x8] sm:$0xff]
    %v105 = vld [vmem:[#allocation5 + $0x10] sm:$0xff]
    %v106 = vld [vmem:[#allocation5 + $0x18] sm:$0xff]
    %v107 = vld [vmem:[#allocation5 + $0x20] sm:$0xff]
    %v108 = vld [vmem:[#allocation5 + $0x28] sm:$0xff]
    %v109 = vld [vmem:[#allocation5 + $0x30] sm:$0xff]
    %v110 = vld [vmem:[#allocation5 + $0x38] sm:$0xff]
    %v111 = vld [vmem:[#allocation5 + $0x40] sm:$0xff]
    %v112 = vld [vmem:[#allocation5 + $0x48] sm:$0xff]
    %v113 = vld [vmem:[#allocation5 + $0x50] sm:$0xff]
    %v114 = vld [vmem:[#allocation5 + $0x58] sm:$0xff]
    %v115 = vld [vmem:[#allocation5 + $0x60] sm:$0xff]
    %v116 = vld [vmem:[#allocation5 + $0x68] sm:$0xff]
    %v117 = vld [vmem:[#allocation5 + $0x70] sm:$0xff]
    %v118 = vld [vmem:[#allocation5 + $0x78] sm:$0xff]
    %v119 = vld [vmem:[%s2] sm:$0x1]
    %v121 = vlaneseq
    %v122 = vshrl.u32 %v121, 7
    %v123 = vsub.s32 0, %v122
    %v124 = vrot.slane %v119, %v123
    %126 = vmatprep.subr.mxu0 0.0
    %127 = vmatpush1.msra.mxu0 %v118
    %128 = vmatprep.subr.mxu0 0.0
    %129 = vmatpush1.msra.mxu0 %v117
    %130 = vmatprep.subr.mxu0 0.0
    %131 = vmatpush1.msra.mxu0 %v116
    %132 = vmatprep.subr.mxu0 0.0
    %133 = vmatpush1.msra.mxu0 %v115
    %134 = vmatprep.subr.mxu0 0.0
    %135 = vmatpush1.msra.mxu0 %v114
    %136 = vmatprep.subr.mxu0 0.0
    %137 = vmatpush1.msra.mxu0 %v113
    %138 = vmatprep.subr.mxu0 0.0
    %139 = vmatpush1.msra.mxu0 %v112
    %140 = vmatprep.subr.mxu0 0.0
    %141 = vmatpush1.msra.mxu0 %v111
    %142 = vmatprep.subr.mxu0 0.0
    %143 = vmatpush1.msra.mxu0 %v110
    %144 = vmatprep.subr.mxu0 0.0
    %145 = vmatpush1.msra.mxu0 %v109
    %146 = vmatprep.subr.mxu0 0.0
    %147 = vmatpush1.msra.mxu0 %v108
    %148 = vmatprep.subr.mxu0 0.0
    %149 = vmatpush1.msra.mxu0 %v107
    %150 = vmatprep.subr.mxu0 0.0
    %151 = vmatpush1.msra.mxu0 %v106
    %152 = vmatprep.subr.mxu0 0.0
    %153 = vmatpush1.msra.mxu0 %v105
    %154 = vmatprep.subr.mxu0 0.0
    %155 = vmatpush1.msra.mxu0 %v104
    %156 = vmatprep.subr.mxu0 0.0
    %157 = vmatpush1.msra.mxu0 %v103
    %158 = vmatprep.subr.mxu0 0.0
    %159 = vmatpush2.msra.mxu0 0.0
    %160 = vmatprep.subr.mxu0 0.0
    %161 = vmatpush2.msra.mxu0 0.0
    %162 = vmatprep.subr.mxu0 0.0
    %163 = vmatpush2.msra.mxu0 0.0
    %164 = vmatprep.subr.mxu0 0.0
    %165 = vmatpush2.msra.mxu0 0.0
    %166 = vmatprep.subr.mxu0 0.0
    %167 = vmatpush2.msra.mxu0 0.0
    %168 = vmatprep.subr.mxu0 0.0
    %169 = vmatpush2.msra.mxu0 0.0
    %170 = vmatprep.subr.mxu0 0.0
    %171 = vmatpush2.msra.mxu0 0.0
    %172 = vmatprep.subr.mxu0 0.0
    %173 = vmatpush2.msra.mxu0 0.0
    %174 = vmatprep.subr.mxu0 0.0
    %175 = vmatpush2.msra.mxu0 0.0
    %176 = vmatprep.subr.mxu0 0.0
    %177 = vmatpush2.msra.mxu0 0.0
    %178 = vmatprep.subr.mxu0 0.0
    %179 = vmatpush2.msra.mxu0 0.0
    %180 = vmatprep.subr.mxu0 0.0
    %181 = vmatpush2.msra.mxu0 0.0
    %182 = vmatprep.subr.mxu0 0.0
    %183 = vmatpush2.msra.mxu0 0.0
    %184 = vmatprep.subr.mxu0 0.0
    %185 = vmatpush2.msra.mxu0 0.0
    %186 = vmatprep.subr.mxu0 0.0
    %187 = vmatpush2.msra.mxu0 0.0
    %188 = vmatprep.subr.mxu0 0.0
    %189 = vmatpush2.msra.mxu0 0.0
    %190 = vmatprep.mubr.f32.mxu0 0.0
    %191 = vmatmul.mubr.f32.gmra.mxu0 %v101
    %v192 = vpop.f32.mrf.mxu0
    %v193 = vadd.f32 %v124, %v192
    %v194 = vpop.f32.mrf.mxu0
    %195 = vmatprep.mubr.f32.mxu0 0.0
    %196 = vmatmul.mubr.f32.gmra.mxu0 %v102
    %v197 = vpop.f32.mrf.mxu0
    %v198 = vadd.f32 %v124, %v197
    %v199 = vpop.f32.mrf.mxu0
    %200 = vdwg.mxu0
    %v201 = vld [vmem:[#allocation7] sm:$0xff]
    %v202 = vld [vmem:[#allocation7 + $0x8] sm:$0xff]
    %v203 = vld [vmem:[#allocation7 + $0x10] sm:$0xff]
    %v204 = vld [vmem:[#allocation7 + $0x18] sm:$0xff]
    %v205 = vld [vmem:[#allocation7 + $0x20] sm:$0xff]
    %v206 = vld [vmem:[#allocation7 + $0x28] sm:$0xff]
    %v207 = vld [vmem:[#allocation7 + $0x30] sm:$0xff]
    %v208 = vld [vmem:[#allocation7 + $0x38] sm:$0xff]
    %v209 = vld [vmem:[#allocation7 + $0x40] sm:$0xff]
    %v210 = vld [vmem:[#allocation7 + $0x48] sm:$0xff]
    %v211 = vld [vmem:[#allocation7 + $0x50] sm:$0xff]
    %v212 = vld [vmem:[#allocation7 + $0x58] sm:$0xff]
    %v213 = vld [vmem:[#allocation7 + $0x60] sm:$0xff]
    %v214 = vld [vmem:[#allocation7 + $0x68] sm:$0xff]
    %v215 = vld [vmem:[#allocation7 + $0x70] sm:$0xff]
    %v216 = vld [vmem:[#allocation7 + $0x78] sm:$0xff]
    %v217 = vld [vmem:[%s4] sm:$0x1]
    %v219 = vlaneseq
    %v220 = vshrl.u32 %v219, 7
    %v221 = vsub.s32 0, %v220
    %v222 = vrot.slane %v217, %v221
    %224 = vmatprep.subr.mxu0 0.0
    %225 = vmatpush1.msra.mxu0 %v216
    %226 = vmatprep.subr.mxu0 0.0
    %227 = vmatpush1.msra.mxu0 %v215
    %228 = vmatprep.subr.mxu0 0.0
    %229 = vmatpush1.msra.mxu0 %v214
    %230 = vmatprep.subr.mxu0 0.0
    %231 = vmatpush1.msra.mxu0 %v213
    %232 = vmatprep.subr.mxu0 0.0
    %233 = vmatpush1.msra.mxu0 %v212
    %234 = vmatprep.subr.mxu0 0.0
    %235 = vmatpush1.msra.mxu0 %v211
    %236 = vmatprep.subr.mxu0 0.0
    %237 = vmatpush1.msra.mxu0 %v210
    %238 = vmatprep.subr.mxu0 0.0
    %239 = vmatpush1.msra.mxu0 %v209
    %240 = vmatprep.subr.mxu0 0.0
    %241 = vmatpush1.msra.mxu0 %v208
    %242 = vmatprep.subr.mxu0 0.0
    %243 = vmatpush1.msra.mxu0 %v207
    %244 = vmatprep.subr.mxu0 0.0
    %245 = vmatpush1.msra.mxu0 %v206
    %246 = vmatprep.subr.mxu0 0.0
    %247 = vmatpush1.msra.mxu0 %v205
    %248 = vmatprep.subr.mxu0 0.0
    %249 = vmatpush1.msra.mxu0 %v204
    %250 = vmatprep.subr.mxu0 0.0
    %251 = vmatpush1.msra.mxu0 %v203
    %252 = vmatprep.subr.mxu0 0.0
    %253 = vmatpush1.msra.mxu0 %v202
    %254 = vmatprep.subr.mxu0 0.0
    %255 = vmatpush1.msra.mxu0 %v201
    %256 = vmatprep.subr.mxu0 0.0
    %257 = vmatpush2.msra.mxu0 0.0
    %258 = vmatprep.subr.mxu0 0.0
    %259 = vmatpush2.msra.mxu0 0.0
    %260 = vmatprep.subr.mxu0 0.0
    %261 = vmatpush2.msra.mxu0 0.0
    %262 = vmatprep.subr.mxu0 0.0
    %263 = vmatpush2.msra.mxu0 0.0
    %264 = vmatprep.subr.mxu0 0.0
    %265 = vmatpush2.msra.mxu0 0.0
    %266 = vmatprep.subr.mxu0 0.0
    %267 = vmatpush2.msra.mxu0 0.0
    %268 = vmatprep.subr.mxu0 0.0
    %269 = vmatpush2.msra.mxu0 0.0
    %270 = vmatprep.subr.mxu0 0.0
    %271 = vmatpush2.msra.mxu0 0.0
    %272 = vmatprep.subr.mxu0 0.0
    %273 = vmatpush2.msra.mxu0 0.0
    %274 = vmatprep.subr.mxu0 0.0
    %275 = vmatpush2.msra.mxu0 0.0
    %276 = vmatprep.subr.mxu0 0.0
    %277 = vmatpush2.msra.mxu0 0.0
    %278 = vmatprep.subr.mxu0 0.0
    %279 = vmatpush2.msra.mxu0 0.0
    %280 = vmatprep.subr.mxu0 0.0
    %281 = vmatpush2.msra.mxu0 0.0
    %282 = vmatprep.subr.mxu0 0.0
    %283 = vmatpush2.msra.mxu0 0.0
    %284 = vmatprep.subr.mxu0 0.0
    %285 = vmatpush2.msra.mxu0 0.0
    %286 = vmatprep.subr.mxu0 0.0
    %287 = vmatpush2.msra.mxu0 0.0
    %288 = vmatprep.mubr.f32.mxu0 0.0
    %289 = vmatmul.mubr.f32.gmra.mxu0 %v193
    %v290 = vpop.f32.mrf.mxu0
    %v291 = vadd.f32 %v222, %v290
    %v292 = vpop.f32.mrf.mxu0
    %293 = vmatprep.mubr.f32.mxu0 0.0
    %294 = vmatmul.mubr.f32.gmra.mxu0 %v198
    %v295 = vpop.f32.mrf.mxu0
    %v296 = vadd.f32 %v222, %v295
    %v297 = vpop.f32.mrf.mxu0
    %298 = vdwg.mxu0
    %v299 = vmul.f32 %v291, 0.5
    %v300 = vmul.f32 %v296, 0.5
    %v301 = vmul.f32 %v291, 0.70710677
    %v302 = vmul.f32 %v296, 0.70710677
    %v303 = verf.f32.pop %v301
    %v304 = verf.f32.pop %v302
    %v305 = vadd.f32 %v303, 1.0
    %v306 = vadd.f32 %v304, 1.0
    %v307 = vmul.f32 %v299, %v305
    %v308 = vmul.f32 %v300, %v306
    %v309 = vld [vmem:[#allocation8] sm:$0xff]
    %v310 = vld [vmem:[#allocation8 + $0x8] sm:$0xff]
    %v311 = vld [vmem:[#allocation8 + $0x10] sm:$0xff]
    %v312 = vld [vmem:[#allocation8 + $0x18] sm:$0xff]
    %v313 = vld [vmem:[#allocation8 + $0x20] sm:$0xff]
    %v314 = vld [vmem:[#allocation8 + $0x28] sm:$0xff]
    %v315 = vld [vmem:[#allocation8 + $0x30] sm:$0xff]
    %v316 = vld [vmem:[#allocation8 + $0x38] sm:$0xff]
    %v317 = vld [vmem:[#allocation8 + $0x40] sm:$0xff]
    %v318 = vld [vmem:[#allocation8 + $0x48] sm:$0xff]
    %v319 = vld [vmem:[#allocation8 + $0x50] sm:$0xff]
    %v320 = vld [vmem:[#allocation8 + $0x58] sm:$0xff]
    %v321 = vld [vmem:[#allocation8 + $0x60] sm:$0xff]
    %v322 = vld [vmem:[#allocation8 + $0x68] sm:$0xff]
    %v323 = vld [vmem:[#allocation8 + $0x70] sm:$0xff]
    %v324 = vld [vmem:[#allocation8 + $0x78] sm:$0xff]
    %v325 = vld [vmem:[%s6] sm:$0x1]
    %v327 = vlaneseq
    %v328 = vshrl.u32 %v327, 7
    %v329 = vsub.s32 0, %v328
    %v330 = vrot.slane %v325, %v329
    %332 = vmatprep.subr.mxu0 0.0
    %333 = vmatpush1.msra.mxu0 %v324
    %334 = vmatprep.subr.mxu0 0.0
    %335 = vmatpush1.msra.mxu0 %v323
    %336 = vmatprep.subr.mxu0 0.0
    %337 = vmatpush1.msra.mxu0 %v322
    %338 = vmatprep.subr.mxu0 0.0
    %339 = vmatpush1.msra.mxu0 %v321
    %340 = vmatprep.subr.mxu0 0.0
    %341 = vmatpush1.msra.mxu0 %v320
    %342 = vmatprep.subr.mxu0 0.0
    %343 = vmatpush1.msra.mxu0 %v319
    %344 = vmatprep.subr.mxu0 0.0
    %345 = vmatpush1.msra.mxu0 %v318
    %346 = vmatprep.subr.mxu0 0.0
    %347 = vmatpush1.msra.mxu0 %v317
    %348 = vmatprep.subr.mxu0 0.0
    %349 = vmatpush1.msra.mxu0 %v316
    %350 = vmatprep.subr.mxu0 0.0
    %351 = vmatpush1.msra.mxu0 %v315
    %352 = vmatprep.subr.mxu0 0.0
    %353 = vmatpush1.msra.mxu0 %v314
    %354 = vmatprep.subr.mxu0 0.0
    %355 = vmatpush1.msra.mxu0 %v313
    %356 = vmatprep.subr.mxu0 0.0
    %357 = vmatpush1.msra.mxu0 %v312
    %358 = vmatprep.subr.mxu0 0.0
    %359 = vmatpush1.msra.mxu0 %v311
    %360 = vmatprep.subr.mxu0 0.0
    %361 = vmatpush1.msra.mxu0 %v310
    %362 = vmatprep.subr.mxu0 0.0
    %363 = vmatpush1.msra.mxu0 %v309
    %364 = vmatprep.subr.mxu0 0.0
    %365 = vmatpush2.msra.mxu0 0.0
    %366 = vmatprep.subr.mxu0 0.0
    %367 = vmatpush2.msra.mxu0 0.0
    %368 = vmatprep.subr.mxu0 0.0
    %369 = vmatpush2.msra.mxu0 0.0
    %370 = vmatprep.subr.mxu0 0.0
    %371 = vmatpush2.msra.mxu0 0.0
    %372 = vmatprep.subr.mxu0 0.0
    %373 = vmatpush2.msra.mxu0 0.0
    %374 = vmatprep.subr.mxu0 0.0
    %375 = vmatpush2.msra.mxu0 0.0
    %376 = vmatprep.subr.mxu0 0.0
    %377 = vmatpush2.msra.mxu0 0.0
    %378 = vmatprep.subr.mxu0 0.0
    %379 = vmatpush2.msra.mxu0 0.0
    %380 = vmatprep.subr.mxu0 0.0
    %381 = vmatpush2.msra.mxu0 0.0
    %382 = vmatprep.subr.mxu0 0.0
    %383 = vmatpush2.msra.mxu0 0.0
    %384 = vmatprep.subr.mxu0 0.0
    %385 = vmatpush2.msra.mxu0 0.0
    %386 = vmatprep.subr.mxu0 0.0
    %387 = vmatpush2.msra.mxu0 0.0
    %388 = vmatprep.subr.mxu0 0.0
    %389 = vmatpush2.msra.mxu0 0.0
    %390 = vmatprep.subr.mxu0 0.0
    %391 = vmatpush2.msra.mxu0 0.0
    %392 = vmatprep.subr.mxu0 0.0
    %393 = vmatpush2.msra.mxu0 0.0
    %394 = vmatprep.subr.mxu0 0.0
    %395 = vmatpush2.msra.mxu0 0.0
    %396 = vmatprep.mubr.f32.mxu0 0.0
    %397 = vmatmul.mubr.f32.gmra.mxu0 %v307
    %v398 = vpop.f32.mrf.mxu0
    %v399 = vadd.f32 %v330, %v398
    %v400 = vpop.f32.mrf.mxu0
    %401 = vmatprep.mubr.f32.mxu0 0.0
    %402 = vmatmul.mubr.f32.gmra.mxu0 %v308
    %v403 = vpop.f32.mrf.mxu0
    %v404 = vadd.f32 %v330, %v403
    %v405 = vpop.f32.mrf.mxu0
    %406 = vdwg.mxu0
    %v407 = vmul.f32 %v399, 0.5
    %v408 = vmul.f32 %v404, 0.5
    %v409 = vmul.f32 %v399, 0.70710677
    %v410 = vmul.f32 %v404, 0.70710677
    %v411 = verf.f32.pop %v409
    %v412 = verf.f32.pop %v410
    %v413 = vadd.f32 %v411, 1.0
    %v414 = vadd.f32 %v412, 1.0
    %v415 = vmul.f32 %v407, %v413
    %v416 = vmul.f32 %v408, %v414
    %v417 = vld [vmem:[#allocation10] sm:$0xff]
    %v418 = vld [vmem:[#allocation10 + $0x8] sm:$0xff]
    %v419 = vld [vmem:[#allocation10 + $0x10] sm:$0xff]
    %v420 = vld [vmem:[#allocation10 + $0x18] sm:$0xff]
    %v421 = vld [vmem:[#allocation10 + $0x20] sm:$0xff]
    %v422 = vld [vmem:[#allocation10 + $0x28] sm:$0xff]
    %v423 = vld [vmem:[#allocation10 + $0x30] sm:$0xff]
    %v424 = vld [vmem:[#allocation10 + $0x38] sm:$0xff]
    %v425 = vld [vmem:[#allocation10 + $0x40] sm:$0xff]
    %v426 = vld [vmem:[#allocation10 + $0x48] sm:$0xff]
    %v427 = vld [vmem:[#allocation10 + $0x50] sm:$0xff]
    %v428 = vld [vmem:[#allocation10 + $0x58] sm:$0xff]
    %v429 = vld [vmem:[#allocation10 + $0x60] sm:$0xff]
    %v430 = vld [vmem:[#allocation10 + $0x68] sm:$0xff]
    %v431 = vld [vmem:[#allocation10 + $0x70] sm:$0xff]
    %v432 = vld [vmem:[#allocation10 + $0x78] sm:$0xff]
    %v433 = vld [vmem:[%s8] sm:$0x1]
    %v435 = vlaneseq
    %v436 = vshrl.u32 %v435, 7
    %v437 = vsub.s32 0, %v436
    %v438 = vrot.slane %v433, %v437
    %440 = vmatprep.subr.mxu0 0.0
    %441 = vmatpush1.msra.mxu0 %v432
    %442 = vmatprep.subr.mxu0 0.0
    %443 = vmatpush1.msra.mxu0 %v431
    %444 = vmatprep.subr.mxu0 0.0
    %445 = vmatpush1.msra.mxu0 %v430
    %446 = vmatprep.subr.mxu0 0.0
    %447 = vmatpush1.msra.mxu0 %v429
    %448 = vmatprep.subr.mxu0 0.0
    %449 = vmatpush1.msra.mxu0 %v428
    %450 = vmatprep.subr.mxu0 0.0
    %451 = vmatpush1.msra.mxu0 %v427
    %452 = vmatprep.subr.mxu0 0.0
    %453 = vmatpush1.msra.mxu0 %v426
    %454 = vmatprep.subr.mxu0 0.0
    %455 = vmatpush1.msra.mxu0 %v425
    %456 = vmatprep.subr.mxu0 0.0
    %457 = vmatpush1.msra.mxu0 %v424
    %458 = vmatprep.subr.mxu0 0.0
    %459 = vmatpush1.msra.mxu0 %v423
    %460 = vmatprep.subr.mxu0 0.0
    %461 = vmatpush1.msra.mxu0 %v422
    %462 = vmatprep.subr.mxu0 0.0
    %463 = vmatpush1.msra.mxu0 %v421
    %464 = vmatprep.subr.mxu0 0.0
    %465 = vmatpush1.msra.mxu0 %v420
    %466 = vmatprep.subr.mxu0 0.0
    %467 = vmatpush1.msra.mxu0 %v419
    %468 = vmatprep.subr.mxu0 0.0
    %469 = vmatpush1.msra.mxu0 %v418
    %470 = vmatprep.subr.mxu0 0.0
    %471 = vmatpush1.msra.mxu0 %v417
    %472 = vmatprep.subr.mxu0 0.0
    %473 = vmatpush2.msra.mxu0 0.0
    %474 = vmatprep.subr.mxu0 0.0
    %475 = vmatpush2.msra.mxu0 0.0
    %476 = vmatprep.subr.mxu0 0.0
    %477 = vmatpush2.msra.mxu0 0.0
    %478 = vmatprep.subr.mxu0 0.0
    %479 = vmatpush2.msra.mxu0 0.0
    %480 = vmatprep.subr.mxu0 0.0
    %481 = vmatpush2.msra.mxu0 0.0
    %482 = vmatprep.subr.mxu0 0.0
    %483 = vmatpush2.msra.mxu0 0.0
    %484 = vmatprep.subr.mxu0 0.0
    %485 = vmatpush2.msra.mxu0 0.0
    %486 = vmatprep.subr.mxu0 0.0
    %487 = vmatpush2.msra.mxu0 0.0
    %488 = vmatprep.subr.mxu0 0.0
    %489 = vmatpush2.msra.mxu0 0.0
    %490 = vmatprep.subr.mxu0 0.0
    %491 = vmatpush2.msra.mxu0 0.0
    %492 = vmatprep.subr.mxu0 0.0
    %493 = vmatpush2.msra.mxu0 0.0
    %494 = vmatprep.subr.mxu0 0.0
    %495 = vmatpush2.msra.mxu0 0.0
    %496 = vmatprep.subr.mxu0 0.0
    %497 = vmatpush2.msra.mxu0 0.0
    %498 = vmatprep.subr.mxu0 0.0
    %499 = vmatpush2.msra.mxu0 0.0
    %500 = vmatprep.subr.mxu0 0.0
    %501 = vmatpush2.msra.mxu0 0.0
    %502 = vmatprep.subr.mxu0 0.0
    %503 = vmatpush2.msra.mxu0 0.0
    %504 = vmatprep.mubr.f32.mxu0 0.0
    %505 = vmatmul.mubr.f32.gmra.mxu0 %v415
    %v506 = vpop.f32.mrf.mxu0
    %v507 = vadd.f32 %v438, %v506
    %v508 = vpop.f32.mrf.mxu0
    %509 = vmatprep.mubr.f32.mxu0 0.0
    %510 = vmatmul.mubr.f32.gmra.mxu0 %v416
    %v511 = vpop.f32.mrf.mxu0
    %v512 = vadd.f32 %v438, %v511
    %v513 = vpop.f32.mrf.mxu0
    %514 = vdwg.mxu0
    %515 = vst [vmem:[#allocation11] sm:$0xff] %v507
    %516 = vst [vmem:[#allocation11 + $0x8] sm:$0xff] %v512
    // Predicated region
    $region58: #{tpu_custom_call.1} parent=1 // pred_check
      _
    $region59: #{tpu_custom_call.1} parent=1 // pred_check_branch
      %518 = sbr.rel (0) target = $region61
    $region60: #{tpu_custom_call.1} parent=1 // pred_region
      %s520 = ssub.s32 256, 256
      %521 = vsyncadd [#allocation4], %s520
      %s522 = sshll.u32 [#allocation11], 4
      %s523 = int_to_ptr.vmem [resolvable:$true] %s522
      %528 = dma.vmem_to_hbm [thread:$0]  %s523, 256, %s9, [#allocation4], 128, 128, 8
    $region61: #{tpu_custom_call.1} parent=1 // pred_fallthru
      _
    // Predicated region
    $region62: #{tpu_custom_call.1} parent=1 // pred_check
      _
    $region63: #{tpu_custom_call.1} parent=1 // pred_check_branch
      %530 = sbr.rel (0) target = $region65
    $region64: #{tpu_custom_call.1} parent=1 // pred_region
      %531 = dma.done [#allocation4], 256
    $region65: #{tpu_custom_call.1} parent=1 // pred_fallthru
      _
    %532 = vsyncpa [#allocation3], 1
    %533 = vsyncpa [#allocation6], 1
    %534 = vsyncpa [#allocation9], 1
    %535 = vsyncpa [#allocation4], 1

</llo_original>
